<compile_context>
chip_gen: v7x
topology: tpu7x:2x2x1
jax: 0.10.0
libtpu: 0.0.40
codegen_flags: <defaults>
</compile_context>

<pallas_src>
import functools

import jax
import jax.numpy as jnp
from jax.experimental import pallas as pl
from jax.experimental.pallas import tpu as pltpu


def _round_up(x, m):
    return ((x + m - 1) // m) * m


def _postnet_fused_kernel(x_ref, w_ref, scale_ref, shift_ref, o_ref, buf_ref,
                          *, n_layers, K, T, pad):
    """Fused postnet forward for one batch element.

    x_ref     : (1, T, C)           channel-padded input (lane-dense)
    w_ref     : (L, K*C, C)         tap-major, channel-padded conv weights
    scale_ref : (L, 1, C)           folded BN scale  (gamma / sqrt(var + eps))
    shift_ref : (L, 1, C)           folded BN shift  (beta - mean * scale)
    o_ref     : (1, T, C)
    buf_ref   : (2, T + K - 1, C)   VMEM ping-pong buffer with zero halos
    """
    # Zero both slots once per batch element: establishes the zero "same"
    # padding halos (interior rows are fully overwritten by every layer).
    buf_ref[...] = jnp.zeros_like(buf_ref)
    buf_ref[0, pad:pad + T, :] = x_ref[0]

    for l in range(n_layers):                      # static unroll over layers
        src = l % 2
        dst = (l + 1) % 2
        # Fold the K taps into one contraction: a[t, k*C + c] = xpad[t+k, c]
        a = jnp.concatenate(
            [buf_ref[src, k:k + T, :] for k in range(K)], axis=-1)  # (T, K*C)
        y = jnp.dot(a, w_ref[l], preferred_element_type=jnp.float32)  # (T, C)
        y = y * scale_ref[l] + shift_ref[l]
        if l != n_layers - 1:
            y = jnp.tanh(y)
            buf_ref[dst, pad:pad + T, :] = y
        else:
            # Dropout is identity in eval mode.
            o_ref[0] = y.astype(o_ref.dtype)


def init_postnet_params(key, odim, n_chans, n_filts, n_layers):
    """Deterministic synthetic parameters matching PyTorch shapes.

    Per layer: conv weight (C_out, C_in, K) [PyTorch layout], BN gamma/beta,
    running_mean/running_var (eval-mode BN).
    """
    params = []
    for layer in range(n_layers):
        ichans = odim if layer == 0 else n_chans
        ochans = odim if layer == n_layers - 1 else n_chans
        key, k_w, k_g, k_b, k_m, k_v = jax.random.split(key, 6)
        w = jax.random.normal(k_w, (ochans, ichans, n_filts), jnp.float32) * 0.1
        gamma = 1.0 + 0.1 * jax.random.normal(k_g, (ochans,), jnp.float32)
        beta = 0.1 * jax.random.normal(k_b, (ochans,), jnp.float32)
        r_mean = 0.1 * jax.random.normal(k_m, (ochans,), jnp.float32)
        r_var = jnp.abs(1.0 + 0.1 * jax.random.normal(k_v, (ochans,), jnp.float32))
        params.append(dict(w=w, gamma=gamma, beta=beta,
                           r_mean=r_mean, r_var=r_var))
    return params


def prepare_postnet_params(params, *, eps=1e-5):
    """One-time preprocessing: tap-major transpose, BN fold, pad channels to
    a lane-dense width, stack over layers."""
    L = len(params)
    K = params[0]["w"].shape[-1]
    c_max = max(max(p["w"].shape[0], p["w"].shape[1]) for p in params)
    C = _round_up(c_max, 128)

    w_stack, scale_stack, shift_stack = [], [], []
    for p in params:
        c_out, c_in, _ = p["w"].shape
        # (C_out, C_in, K) -> tap-major (K, C_in, C_out), zero-pad channels.
        w_kio = jnp.transpose(p["w"], (2, 1, 0))
        w_kio = jnp.pad(w_kio, ((0, 0), (0, C - c_in), (0, C - c_out)))
        w_stack.append(w_kio.reshape(K * C, C))
        scale = p["gamma"] / jnp.sqrt(p["r_var"] + eps)
        shift = p["beta"] - p["r_mean"] * scale
        scale_stack.append(jnp.pad(scale, (0, C - c_out))[None, :])
        shift_stack.append(jnp.pad(shift, (0, C - c_out))[None, :])

    return dict(
        w=jnp.stack(w_stack),          # (L, K*C, C)
        scale=jnp.stack(scale_stack),  # (L, 1, C)
        shift=jnp.stack(shift_stack),  # (L, 1, C)
        n_layers=L, n_filts=K, c_pad=C,
    )


def postnet_forward(xs_bct, prep):
    """xs_bct: (B, odim, T)  ->  (B, odim, T), matching the PyTorch module."""
    B, odim, T = xs_bct.shape
    L = prep["n_layers"]
    K = prep["n_filts"]
    C = prep["c_pad"]
    pad = (K - 1) // 2
    Tp = T + K - 1

    # Channels on the lane axis (NTC layout), zero-padded to lane width once.
    x = jnp.transpose(xs_bct, (0, 2, 1))
    x = jnp.pad(x, ((0, 0), (0, 0), (0, C - odim)))

    kernel = functools.partial(_postnet_fused_kernel,
                               n_layers=L, K=K, T=T, pad=pad)

    out = pl.pallas_call(
        kernel,
        out_shape=jax.ShapeDtypeStruct((B, T, C), jnp.float32),
        grid_spec=pltpu.PrefetchScalarGridSpec(
            num_scalar_prefetch=0,
            grid=(B,),
            in_specs=[
                pl.BlockSpec((1, T, C), lambda b: (b, 0, 0)),
                pl.BlockSpec((L, K * C, C), lambda b: (0, 0, 0)),
                pl.BlockSpec((L, 1, C), lambda b: (0, 0, 0)),
                pl.BlockSpec((L, 1, C), lambda b: (0, 0, 0)),
            ],
            out_specs=pl.BlockSpec((1, T, C), lambda b: (b, 0, 0)),
            scratch_shapes=[pltpu.VMEM((2, Tp, C), jnp.float32)],
        ),
        compiler_params=pltpu.CompilerParams(
            dimension_semantics=("parallel",),
            vmem_limit_bytes=64 * 1024 * 1024,
        ),
    )(x, prep["w"], prep["scale"], prep["shift"])

    return jnp.transpose(out[:, :, :odim], (0, 2, 1))


def postnet_reference(xs_bct, params, *, eps=1e-5):
    """Pure-JAX reference (lax conv) for verification."""
    n_layers = len(params)
    x = xs_bct
    for i, p in enumerate(params):
        y = jax.lax.conv_general_dilated(
            x, p["w"], window_strides=(1,), padding="SAME",
            dimension_numbers=("NCH", "OIH", "NCH"))
        scale = (p["gamma"] / jnp.sqrt(p["r_var"] + eps))[None, :, None]
        shift = (p["beta"] - p["r_mean"] * p["gamma"]
                 / jnp.sqrt(p["r_var"] + eps))[None, :, None]
        y = y * scale + shift
        if i != n_layers - 1:
            y = jnp.tanh(y)
        x = y
    return x


if __name__ == "__main__":
    # Small shapes consistent with the module: input (B, odim, Tmax)
    B, odim, T = 2, 8, 16
    n_layers, n_chans, n_filts = 5, 32, 5

    key = jax.random.PRNGKey(0)
    key, k_x = jax.random.split(key)
    xs = jax.random.normal(k_x, (B, odim, T), jnp.float32)

    params = init_postnet_params(key, odim, n_chans, n_filts, n_layers)
    prep = prepare_postnet_params(params)

    out = jax.block_until_ready(postnet_forward(xs, prep))
    ref = jax.block_until_ready(postnet_reference(xs, params))

    assert out.shape == (B, odim, T)
    assert jnp.allclose(out, ref, atol=1e-4, rtol=1e-4)
    print("KERNEL_OK")
</pallas_src>

<mosaic_0001>
module attributes {stable_mosaic.version = 11 : i64} {
  func.func @_postnet_fused_kernel(%arg0: i32, %arg1: memref<1x16x128xf32, #tpu.memory_space<vmem>>, %arg2: memref<5x640x128xf32, #tpu.memory_space<vmem>>, %arg3: memref<5x1x128xf32, #tpu.memory_space<vmem>>, %arg4: memref<5x1x128xf32, #tpu.memory_space<vmem>>, %arg5: memref<1x16x128xf32, #tpu.memory_space<vmem>>, %arg6: memref<2x20x128xf32, #tpu.memory_space<vmem>>) attributes {dimension_semantics = [#tpu.dimension_semantics<parallel>], iteration_bounds = array<i64: 2>, scalar_prefetch = 0 : i64, scratch_operands = 1 : i64, tpu.core_type = #tpu.core_type<tc>, window_params = [{transform_indices = @transform_0, window_bounds = array<i64: 1, 16, 128>}, {pipeline_mode = #tpu.pipeline_mode<synchronous>, transform_indices = @transform_1, window_bounds = array<i64: 5, 640, 128>}, {pipeline_mode = #tpu.pipeline_mode<synchronous>, transform_indices = @transform_2, window_bounds = array<i64: 5, 1, 128>}, {pipeline_mode = #tpu.pipeline_mode<synchronous>, transform_indices = @transform_3, window_bounds = array<i64: 5, 1, 128>}, {transform_indices = @transform_4, window_bounds = array<i64: 1, 16, 128>}]} {
    %cst = arith.constant 0.000000e+00 : f32
    %0 = vector.broadcast %cst : f32 to vector<2x20x128xf32>
    %c0 = arith.constant 0 : index
    %c0_0 = arith.constant 0 : index
    %c0_1 = arith.constant 0 : index
    %1 = vector.load %arg6[%c0, %c0_0, %c0_1] : memref<2x20x128xf32, #tpu.memory_space<vmem>>, vector<2x20x128xf32>
    tpu.vector_store %arg6[%c0, %c0_0, %c0_1], %0 {strides = array<i32>} : memref<2x20x128xf32, #tpu.memory_space<vmem>>, vector<2x20x128xf32>,
    %c0_2 = arith.constant 0 : index
    %c0_3 = arith.constant 0 : index
    %c0_4 = arith.constant 0 : index
    %2 = vector.load %arg1[%c0_2, %c0_3, %c0_4] : memref<1x16x128xf32, #tpu.memory_space<vmem>>, vector<1x16x128xf32>
    %3 = vector.shape_cast %2 : vector<1x16x128xf32> to vector<16x128xf32>
    %c0_5 = arith.constant 0 : index
    %c2 = arith.constant 2 : index
    %c0_6 = arith.constant 0 : index
    %4 = vector.load %arg6[%c0_5, %c2, %c0_6] : memref<2x20x128xf32, #tpu.memory_space<vmem>>, vector<1x16x128xf32>
    %5 = vector.shape_cast %4 : vector<1x16x128xf32> to vector<16x128xf32>
    %6 = vector.shape_cast %3 : vector<16x128xf32> to vector<1x16x128xf32>
    tpu.vector_store %arg6[%c0_5, %c2, %c0_6], %6 {strides = array<i32>} : memref<2x20x128xf32, #tpu.memory_space<vmem>>, vector<1x16x128xf32>,
    %c0_7 = arith.constant 0 : index
    %c0_8 = arith.constant 0 : index
    %c0_9 = arith.constant 0 : index
    %7 = vector.load %arg6[%c0_7, %c0_8, %c0_9] : memref<2x20x128xf32, #tpu.memory_space<vmem>>, vector<1x16x128xf32>
    %8 = vector.shape_cast %7 : vector<1x16x128xf32> to vector<16x128xf32>
    %c0_10 = arith.constant 0 : index
    %c1 = arith.constant 1 : index
    %c0_11 = arith.constant 0 : index
    %9 = vector.load %arg6[%c0_10, %c1, %c0_11] : memref<2x20x128xf32, #tpu.memory_space<vmem>>, vector<1x16x128xf32>
    %10 = vector.shape_cast %9 : vector<1x16x128xf32> to vector<16x128xf32>
    %c0_12 = arith.constant 0 : index
    %c2_13 = arith.constant 2 : index
    %c0_14 = arith.constant 0 : index
    %11 = vector.load %arg6[%c0_12, %c2_13, %c0_14] : memref<2x20x128xf32, #tpu.memory_space<vmem>>, vector<1x16x128xf32>
    %12 = vector.shape_cast %11 : vector<1x16x128xf32> to vector<16x128xf32>
    %c0_15 = arith.constant 0 : index
    %c3 = arith.constant 3 : index
    %c0_16 = arith.constant 0 : index
    %13 = vector.load %arg6[%c0_15, %c3, %c0_16] : memref<2x20x128xf32, #tpu.memory_space<vmem>>, vector<1x16x128xf32>
    %14 = vector.shape_cast %13 : vector<1x16x128xf32> to vector<16x128xf32>
    %c0_17 = arith.constant 0 : index
    %c4 = arith.constant 4 : index
    %c0_18 = arith.constant 0 : index
    %15 = vector.load %arg6[%c0_17, %c4, %c0_18] : memref<2x20x128xf32, #tpu.memory_space<vmem>>, vector<1x16x128xf32>
    %16 = vector.shape_cast %15 : vector<1x16x128xf32> to vector<16x128xf32>
    %17 = tpu.concatenate %8, %10, %12, %14, %16 in 1 : vector<16x128xf32>, vector<16x128xf32>, vector<16x128xf32>, vector<16x128xf32>, vector<16x128xf32> -> vector<16x640xf32>
    %c0_19 = arith.constant 0 : index
    %c0_20 = arith.constant 0 : index
    %c0_21 = arith.constant 0 : index
    %18 = vector.load %arg2[%c0_19, %c0_20, %c0_21] : memref<5x640x128xf32, #tpu.memory_space<vmem>>, vector<1x640x128xf32>
    %19 = vector.shape_cast %18 : vector<1x640x128xf32> to vector<640x128xf32>
    %cst_22 = arith.constant dense<0.000000e+00> : vector<16x128xf32>
    %20 = tpu.matmul %17, %19, %cst_22 {dimension_numbers = #tpu.dot_dimension_numbers<[1], [0], [0], [1], [0, 0, 1, 1], [], []>} : vector<16x640xf32>, vector<640x128xf32>, vector<16x128xf32> -> vector<16x128xf32>
    %c0_23 = arith.constant 0 : index
    %c0_24 = arith.constant 0 : index
    %c0_25 = arith.constant 0 : index
    %21 = vector.load %arg3[%c0_23, %c0_24, %c0_25] : memref<5x1x128xf32, #tpu.memory_space<vmem>>, vector<1x1x128xf32>
    %22 = vector.shape_cast %21 : vector<1x1x128xf32> to vector<1x128xf32>
    %23 = vector.broadcast %22 : vector<1x128xf32> to vector<16x128xf32>
    %24 = arith.mulf %20, %23 : vector<16x128xf32>
    %c0_26 = arith.constant 0 : index
    %c0_27 = arith.constant 0 : index
    %c0_28 = arith.constant 0 : index
    %25 = vector.load %arg4[%c0_26, %c0_27, %c0_28] : memref<5x1x128xf32, #tpu.memory_space<vmem>>, vector<1x1x128xf32>
    %26 = vector.shape_cast %25 : vector<1x1x128xf32> to vector<1x128xf32>
    %27 = vector.broadcast %26 : vector<1x128xf32> to vector<16x128xf32>
    %28 = arith.addf %24, %27 : vector<16x128xf32>
    %29 = math.tanh %28 : vector<16x128xf32>
    %c1_29 = arith.constant 1 : index
    %c2_30 = arith.constant 2 : index
    %c0_31 = arith.constant 0 : index
    %30 = vector.load %arg6[%c1_29, %c2_30, %c0_31] : memref<2x20x128xf32, #tpu.memory_space<vmem>>, vector<1x16x128xf32>
    %31 = vector.shape_cast %30 : vector<1x16x128xf32> to vector<16x128xf32>
    %32 = vector.shape_cast %29 : vector<16x128xf32> to vector<1x16x128xf32>
    tpu.vector_store %arg6[%c1_29, %c2_30, %c0_31], %32 {strides = array<i32>} : memref<2x20x128xf32, #tpu.memory_space<vmem>>, vector<1x16x128xf32>,
    %c1_32 = arith.constant 1 : index
    %c0_33 = arith.constant 0 : index
    %c0_34 = arith.constant 0 : index
    %33 = vector.load %arg6[%c1_32, %c0_33, %c0_34] : memref<2x20x128xf32, #tpu.memory_space<vmem>>, vector<1x16x128xf32>
    %34 = vector.shape_cast %33 : vector<1x16x128xf32> to vector<16x128xf32>
    %c1_35 = arith.constant 1 : index
    %c1_36 = arith.constant 1 : index
    %c0_37 = arith.constant 0 : index
    %35 = vector.load %arg6[%c1_35, %c1_36, %c0_37] : memref<2x20x128xf32, #tpu.memory_space<vmem>>, vector<1x16x128xf32>
    %36 = vector.shape_cast %35 : vector<1x16x128xf32> to vector<16x128xf32>
    %c1_38 = arith.constant 1 : index
    %c2_39 = arith.constant 2 : index
    %c0_40 = arith.constant 0 : index
    %37 = vector.load %arg6[%c1_38, %c2_39, %c0_40] : memref<2x20x128xf32, #tpu.memory_space<vmem>>, vector<1x16x128xf32>
    %38 = vector.shape_cast %37 : vector<1x16x128xf32> to vector<16x128xf32>
    %c1_41 = arith.constant 1 : index
    %c3_42 = arith.constant 3 : index
    %c0_43 = arith.constant 0 : index
    %39 = vector.load %arg6[%c1_41, %c3_42, %c0_43] : memref<2x20x128xf32, #tpu.memory_space<vmem>>, vector<1x16x128xf32>
    %40 = vector.shape_cast %39 : vector<1x16x128xf32> to vector<16x128xf32>
    %c1_44 = arith.constant 1 : index
    %c4_45 = arith.constant 4 : index
    %c0_46 = arith.constant 0 : index
    %41 = vector.load %arg6[%c1_44, %c4_45, %c0_46] : memref<2x20x128xf32, #tpu.memory_space<vmem>>, vector<1x16x128xf32>
    %42 = vector.shape_cast %41 : vector<1x16x128xf32> to vector<16x128xf32>
    %43 = tpu.concatenate %34, %36, %38, %40, %42 in 1 : vector<16x128xf32>, vector<16x128xf32>, vector<16x128xf32>, vector<16x128xf32>, vector<16x128xf32> -> vector<16x640xf32>
    %c1_47 = arith.constant 1 : index
    %c0_48 = arith.constant 0 : index
    %c0_49 = arith.constant 0 : index
    %44 = vector.load %arg2[%c1_47, %c0_48, %c0_49] : memref<5x640x128xf32, #tpu.memory_space<vmem>>, vector<1x640x128xf32>
    %45 = vector.shape_cast %44 : vector<1x640x128xf32> to vector<640x128xf32>
    %cst_50 = arith.constant dense<0.000000e+00> : vector<16x128xf32>
    %46 = tpu.matmul %43, %45, %cst_50 {dimension_numbers = #tpu.dot_dimension_numbers<[1], [0], [0], [1], [0, 0, 1, 1], [], []>} : vector<16x640xf32>, vector<640x128xf32>, vector<16x128xf32> -> vector<16x128xf32>
    %c1_51 = arith.constant 1 : index
    %c0_52 = arith.constant 0 : index
    %c0_53 = arith.constant 0 : index
    %47 = vector.load %arg3[%c1_51, %c0_52, %c0_53] : memref<5x1x128xf32, #tpu.memory_space<vmem>>, vector<1x1x128xf32>
    %48 = vector.shape_cast %47 : vector<1x1x128xf32> to vector<1x128xf32>
    %49 = vector.broadcast %48 : vector<1x128xf32> to vector<16x128xf32>
    %50 = arith.mulf %46, %49 : vector<16x128xf32>
    %c1_54 = arith.constant 1 : index
    %c0_55 = arith.constant 0 : index
    %c0_56 = arith.constant 0 : index
    %51 = vector.load %arg4[%c1_54, %c0_55, %c0_56] : memref<5x1x128xf32, #tpu.memory_space<vmem>>, vector<1x1x128xf32>
    %52 = vector.shape_cast %51 : vector<1x1x128xf32> to vector<1x128xf32>
    %53 = vector.broadcast %52 : vector<1x128xf32> to vector<16x128xf32>
    %54 = arith.addf %50, %53 : vector<16x128xf32>
    %55 = math.tanh %54 : vector<16x128xf32>
    %c0_57 = arith.constant 0 : index
    %c2_58 = arith.constant 2 : index
    %c0_59 = arith.constant 0 : index
    %56 = vector.load %arg6[%c0_57, %c2_58, %c0_59] : memref<2x20x128xf32, #tpu.memory_space<vmem>>, vector<1x16x128xf32>
    %57 = vector.shape_cast %56 : vector<1x16x128xf32> to vector<16x128xf32>
    %58 = vector.shape_cast %55 : vector<16x128xf32> to vector<1x16x128xf32>
    tpu.vector_store %arg6[%c0_57, %c2_58, %c0_59], %58 {strides = array<i32>} : memref<2x20x128xf32, #tpu.memory_space<vmem>>, vector<1x16x128xf32>,
    %c0_60 = arith.constant 0 : index
    %c0_61 = arith.constant 0 : index
    %c0_62 = arith.constant 0 : index
    %59 = vector.load %arg6[%c0_60, %c0_61, %c0_62] : memref<2x20x128xf32, #tpu.memory_space<vmem>>, vector<1x16x128xf32>
    %60 = vector.shape_cast %59 : vector<1x16x128xf32> to vector<16x128xf32>
    %c0_63 = arith.constant 0 : index
    %c1_64 = arith.constant 1 : index
    %c0_65 = arith.constant 0 : index
    %61 = vector.load %arg6[%c0_63, %c1_64, %c0_65] : memref<2x20x128xf32, #tpu.memory_space<vmem>>, vector<1x16x128xf32>
    %62 = vector.shape_cast %61 : vector<1x16x128xf32> to vector<16x128xf32>
    %c0_66 = arith.constant 0 : index
    %c2_67 = arith.constant 2 : index
    %c0_68 = arith.constant 0 : index
    %63 = vector.load %arg6[%c0_66, %c2_67, %c0_68] : memref<2x20x128xf32, #tpu.memory_space<vmem>>, vector<1x16x128xf32>
    %64 = vector.shape_cast %63 : vector<1x16x128xf32> to vector<16x128xf32>
    %c0_69 = arith.constant 0 : index
    %c3_70 = arith.constant 3 : index
    %c0_71 = arith.constant 0 : index
    %65 = vector.load %arg6[%c0_69, %c3_70, %c0_71] : memref<2x20x128xf32, #tpu.memory_space<vmem>>, vector<1x16x128xf32>
    %66 = vector.shape_cast %65 : vector<1x16x128xf32> to vector<16x128xf32>
    %c0_72 = arith.constant 0 : index
    %c4_73 = arith.constant 4 : index
    %c0_74 = arith.constant 0 : index
    %67 = vector.load %arg6[%c0_72, %c4_73, %c0_74] : memref<2x20x128xf32, #tpu.memory_space<vmem>>, vector<1x16x128xf32>
    %68 = vector.shape_cast %67 : vector<1x16x128xf32> to vector<16x128xf32>
    %69 = tpu.concatenate %60, %62, %64, %66, %68 in 1 : vector<16x128xf32>, vector<16x128xf32>, vector<16x128xf32>, vector<16x128xf32>, vector<16x128xf32> -> vector<16x640xf32>
    %c2_75 = arith.constant 2 : index
    %c0_76 = arith.constant 0 : index
    %c0_77 = arith.constant 0 : index
    %70 = vector.load %arg2[%c2_75, %c0_76, %c0_77] : memref<5x640x128xf32, #tpu.memory_space<vmem>>, vector<1x640x128xf32>
    %71 = vector.shape_cast %70 : vector<1x640x128xf32> to vector<640x128xf32>
    %cst_78 = arith.constant dense<0.000000e+00> : vector<16x128xf32>
    %72 = tpu.matmul %69, %71, %cst_78 {dimension_numbers = #tpu.dot_dimension_numbers<[1], [0], [0], [1], [0, 0, 1, 1], [], []>} : vector<16x640xf32>, vector<640x128xf32>, vector<16x128xf32> -> vector<16x128xf32>
    %c2_79 = arith.constant 2 : index
    %c0_80 = arith.constant 0 : index
    %c0_81 = arith.constant 0 : index
    %73 = vector.load %arg3[%c2_79, %c0_80, %c0_81] : memref<5x1x128xf32, #tpu.memory_space<vmem>>, vector<1x1x128xf32>
    %74 = vector.shape_cast %73 : vector<1x1x128xf32> to vector<1x128xf32>
    %75 = vector.broadcast %74 : vector<1x128xf32> to vector<16x128xf32>
    %76 = arith.mulf %72, %75 : vector<16x128xf32>
    %c2_82 = arith.constant 2 : index
    %c0_83 = arith.constant 0 : index
    %c0_84 = arith.constant 0 : index
    %77 = vector.load %arg4[%c2_82, %c0_83, %c0_84] : memref<5x1x128xf32, #tpu.memory_space<vmem>>, vector<1x1x128xf32>
    %78 = vector.shape_cast %77 : vector<1x1x128xf32> to vector<1x128xf32>
    %79 = vector.broadcast %78 : vector<1x128xf32> to vector<16x128xf32>
    %80 = arith.addf %76, %79 : vector<16x128xf32>
    %81 = math.tanh %80 : vector<16x128xf32>
    %c1_85 = arith.constant 1 : index
    %c2_86 = arith.constant 2 : index
    %c0_87 = arith.constant 0 : index
    %82 = vector.load %arg6[%c1_85, %c2_86, %c0_87] : memref<2x20x128xf32, #tpu.memory_space<vmem>>, vector<1x16x128xf32>
    %83 = vector.shape_cast %82 : vector<1x16x128xf32> to vector<16x128xf32>
    %84 = vector.shape_cast %81 : vector<16x128xf32> to vector<1x16x128xf32>
    tpu.vector_store %arg6[%c1_85, %c2_86, %c0_87], %84 {strides = array<i32>} : memref<2x20x128xf32, #tpu.memory_space<vmem>>, vector<1x16x128xf32>,
    %c1_88 = arith.constant 1 : index
    %c0_89 = arith.constant 0 : index
    %c0_90 = arith.constant 0 : index
    %85 = vector.load %arg6[%c1_88, %c0_89, %c0_90] : memref<2x20x128xf32, #tpu.memory_space<vmem>>, vector<1x16x128xf32>
    %86 = vector.shape_cast %85 : vector<1x16x128xf32> to vector<16x128xf32>
    %c1_91 = arith.constant 1 : index
    %c1_92 = arith.constant 1 : index
    %c0_93 = arith.constant 0 : index
    %87 = vector.load %arg6[%c1_91, %c1_92, %c0_93] : memref<2x20x128xf32, #tpu.memory_space<vmem>>, vector<1x16x128xf32>
    %88 = vector.shape_cast %87 : vector<1x16x128xf32> to vector<16x128xf32>
    %c1_94 = arith.constant 1 : index
    %c2_95 = arith.constant 2 : index
    %c0_96 = arith.constant 0 : index
    %89 = vector.load %arg6[%c1_94, %c2_95, %c0_96] : memref<2x20x128xf32, #tpu.memory_space<vmem>>, vector<1x16x128xf32>
    %90 = vector.shape_cast %89 : vector<1x16x128xf32> to vector<16x128xf32>
    %c1_97 = arith.constant 1 : index
    %c3_98 = arith.constant 3 : index
    %c0_99 = arith.constant 0 : index
    %91 = vector.load %arg6[%c1_97, %c3_98, %c0_99] : memref<2x20x128xf32, #tpu.memory_space<vmem>>, vector<1x16x128xf32>
    %92 = vector.shape_cast %91 : vector<1x16x128xf32> to vector<16x128xf32>
    %c1_100 = arith.constant 1 : index
    %c4_101 = arith.constant 4 : index
    %c0_102 = arith.constant 0 : index
    %93 = vector.load %arg6[%c1_100, %c4_101, %c0_102] : memref<2x20x128xf32, #tpu.memory_space<vmem>>, vector<1x16x128xf32>
    %94 = vector.shape_cast %93 : vector<1x16x128xf32> to vector<16x128xf32>
    %95 = tpu.concatenate %86, %88, %90, %92, %94 in 1 : vector<16x128xf32>, vector<16x128xf32>, vector<16x128xf32>, vector<16x128xf32>, vector<16x128xf32> -> vector<16x640xf32>
    %c3_103 = arith.constant 3 : index
    %c0_104 = arith.constant 0 : index
    %c0_105 = arith.constant 0 : index
    %96 = vector.load %arg2[%c3_103, %c0_104, %c0_105] : memref<5x640x128xf32, #tpu.memory_space<vmem>>, vector<1x640x128xf32>
    %97 = vector.shape_cast %96 : vector<1x640x128xf32> to vector<640x128xf32>
    %cst_106 = arith.constant dense<0.000000e+00> : vector<16x128xf32>
    %98 = tpu.matmul %95, %97, %cst_106 {dimension_numbers = #tpu.dot_dimension_numbers<[1], [0], [0], [1], [0, 0, 1, 1], [], []>} : vector<16x640xf32>, vector<640x128xf32>, vector<16x128xf32> -> vector<16x128xf32>
    %c3_107 = arith.constant 3 : index
    %c0_108 = arith.constant 0 : index
    %c0_109 = arith.constant 0 : index
    %99 = vector.load %arg3[%c3_107, %c0_108, %c0_109] : memref<5x1x128xf32, #tpu.memory_space<vmem>>, vector<1x1x128xf32>
    %100 = vector.shape_cast %99 : vector<1x1x128xf32> to vector<1x128xf32>
    %101 = vector.broadcast %100 : vector<1x128xf32> to vector<16x128xf32>
    %102 = arith.mulf %98, %101 : vector<16x128xf32>
    %c3_110 = arith.constant 3 : index
    %c0_111 = arith.constant 0 : index
    %c0_112 = arith.constant 0 : index
    %103 = vector.load %arg4[%c3_110, %c0_111, %c0_112] : memref<5x1x128xf32, #tpu.memory_space<vmem>>, vector<1x1x128xf32>
    %104 = vector.shape_cast %103 : vector<1x1x128xf32> to vector<1x128xf32>
    %105 = vector.broadcast %104 : vector<1x128xf32> to vector<16x128xf32>
    %106 = arith.addf %102, %105 : vector<16x128xf32>
    %107 = math.tanh %106 : vector<16x128xf32>
    %c0_113 = arith.constant 0 : index
    %c2_114 = arith.constant 2 : index
    %c0_115 = arith.constant 0 : index
    %108 = vector.load %arg6[%c0_113, %c2_114, %c0_115] : memref<2x20x128xf32, #tpu.memory_space<vmem>>, vector<1x16x128xf32>
    %109 = vector.shape_cast %108 : vector<1x16x128xf32> to vector<16x128xf32>
    %110 = vector.shape_cast %107 : vector<16x128xf32> to vector<1x16x128xf32>
    tpu.vector_store %arg6[%c0_113, %c2_114, %c0_115], %110 {strides = array<i32>} : memref<2x20x128xf32, #tpu.memory_space<vmem>>, vector<1x16x128xf32>,
    %c0_116 = arith.constant 0 : index
    %c0_117 = arith.constant 0 : index
    %c0_118 = arith.constant 0 : index
    %111 = vector.load %arg6[%c0_116, %c0_117, %c0_118] : memref<2x20x128xf32, #tpu.memory_space<vmem>>, vector<1x16x128xf32>
    %112 = vector.shape_cast %111 : vector<1x16x128xf32> to vector<16x128xf32>
    %c0_119 = arith.constant 0 : index
    %c1_120 = arith.constant 1 : index
    %c0_121 = arith.constant 0 : index
    %113 = vector.load %arg6[%c0_119, %c1_120, %c0_121] : memref<2x20x128xf32, #tpu.memory_space<vmem>>, vector<1x16x128xf32>
    %114 = vector.shape_cast %113 : vector<1x16x128xf32> to vector<16x128xf32>
    %c0_122 = arith.constant 0 : index
    %c2_123 = arith.constant 2 : index
    %c0_124 = arith.constant 0 : index
    %115 = vector.load %arg6[%c0_122, %c2_123, %c0_124] : memref<2x20x128xf32, #tpu.memory_space<vmem>>, vector<1x16x128xf32>
    %116 = vector.shape_cast %115 : vector<1x16x128xf32> to vector<16x128xf32>
    %c0_125 = arith.constant 0 : index
    %c3_126 = arith.constant 3 : index
    %c0_127 = arith.constant 0 : index
    %117 = vector.load %arg6[%c0_125, %c3_126, %c0_127] : memref<2x20x128xf32, #tpu.memory_space<vmem>>, vector<1x16x128xf32>
    %118 = vector.shape_cast %117 : vector<1x16x128xf32> to vector<16x128xf32>
    %c0_128 = arith.constant 0 : index
    %c4_129 = arith.constant 4 : index
    %c0_130 = arith.constant 0 : index
    %119 = vector.load %arg6[%c0_128, %c4_129, %c0_130] : memref<2x20x128xf32, #tpu.memory_space<vmem>>, vector<1x16x128xf32>
    %120 = vector.shape_cast %119 : vector<1x16x128xf32> to vector<16x128xf32>
    %121 = tpu.concatenate %112, %114, %116, %118, %120 in 1 : vector<16x128xf32>, vector<16x128xf32>, vector<16x128xf32>, vector<16x128xf32>, vector<16x128xf32> -> vector<16x640xf32>
    %c4_131 = arith.constant 4 : index
    %c0_132 = arith.constant 0 : index
    %c0_133 = arith.constant 0 : index
    %122 = vector.load %arg2[%c4_131, %c0_132, %c0_133] : memref<5x640x128xf32, #tpu.memory_space<vmem>>, vector<1x640x128xf32>
    %123 = vector.shape_cast %122 : vector<1x640x128xf32> to vector<640x128xf32>
    %cst_134 = arith.constant dense<0.000000e+00> : vector<16x128xf32>
    %124 = tpu.matmul %121, %123, %cst_134 {dimension_numbers = #tpu.dot_dimension_numbers<[1], [0], [0], [1], [0, 0, 1, 1], [], []>} : vector<16x640xf32>, vector<640x128xf32>, vector<16x128xf32> -> vector<16x128xf32>
    %c4_135 = arith.constant 4 : index
    %c0_136 = arith.constant 0 : index
    %c0_137 = arith.constant 0 : index
    %125 = vector.load %arg3[%c4_135, %c0_136, %c0_137] : memref<5x1x128xf32, #tpu.memory_space<vmem>>, vector<1x1x128xf32>
    %126 = vector.shape_cast %125 : vector<1x1x128xf32> to vector<1x128xf32>
    %127 = vector.broadcast %126 : vector<1x128xf32> to vector<16x128xf32>
    %128 = arith.mulf %124, %127 : vector<16x128xf32>
    %c4_138 = arith.constant 4 : index
    %c0_139 = arith.constant 0 : index
    %c0_140 = arith.constant 0 : index
    %129 = vector.load %arg4[%c4_138, %c0_139, %c0_140] : memref<5x1x128xf32, #tpu.memory_space<vmem>>, vector<1x1x128xf32>
    %130 = vector.shape_cast %129 : vector<1x1x128xf32> to vector<1x128xf32>
    %131 = vector.broadcast %130 : vector<1x128xf32> to vector<16x128xf32>
    %132 = arith.addf %128, %131 : vector<16x128xf32>
    %c0_141 = arith.constant 0 : index
    %c0_142 = arith.constant 0 : index
    %c0_143 = arith.constant 0 : index
    %133 = vector.load %arg5[%c0_141, %c0_142, %c0_143] : memref<1x16x128xf32, #tpu.memory_space<vmem>>, vector<1x16x128xf32>
    %134 = vector.shape_cast %133 : vector<1x16x128xf32> to vector<16x128xf32>
    %135 = vector.shape_cast %132 : vector<16x128xf32> to vector<1x16x128xf32>
    tpu.vector_store %arg5[%c0_141, %c0_142, %c0_143], %135 {strides = array<i32>} : memref<1x16x128xf32, #tpu.memory_space<vmem>>, vector<1x16x128xf32>,
    return
  }
  func.func @transform_0(%arg0: i32) -> (i32, i32, i32) {
    %c0_i32 = arith.constant 0 : i32
    %c0_i32_0 = arith.constant 0 : i32
    %c0_i32_1 = arith.constant 0 : i32
    return %arg0, %c0_i32, %c0_i32_0 : i32, i32, i32
  }
  func.func @transform_1(%arg0: i32) -> (i32, i32, i32) {
    %c0_i32 = arith.constant 0 : i32
    %c0_i32_0 = arith.constant 0 : i32
    %c0_i32_1 = arith.constant 0 : i32
    %c0_i32_2 = arith.constant 0 : i32
    return %c0_i32, %c0_i32_0, %c0_i32_1 : i32, i32, i32
  }
  func.func @transform_2(%arg0: i32) -> (i32, i32, i32) {
    %c0_i32 = arith.constant 0 : i32
    %c0_i32_0 = arith.constant 0 : i32
    %c0_i32_1 = arith.constant 0 : i32
    %c0_i32_2 = arith.constant 0 : i32
    return %c0_i32, %c0_i32_0, %c0_i32_1 : i32, i32, i32
  }
  func.func @transform_3(%arg0: i32) -> (i32, i32, i32) {
    %c0_i32 = arith.constant 0 : i32
    %c0_i32_0 = arith.constant 0 : i32
    %c0_i32_1 = arith.constant 0 : i32
    %c0_i32_2 = arith.constant 0 : i32
    return %c0_i32, %c0_i32_0, %c0_i32_1 : i32, i32, i32
  }
  func.func @transform_4(%arg0: i32) -> (i32, i32, i32) {
    %c0_i32 = arith.constant 0 : i32
    %c0_i32_0 = arith.constant 0 : i32
    %c0_i32_1 = arith.constant 0 : i32
    return %arg0, %c0_i32, %c0_i32_0 : i32, i32, i32
  }
}

</mosaic_0001>

<llo_original>
// kernel: tpu_custom_call.1
$region0: #{tpu_custom_call.1}
  #allocation0 [shape = 'u32[]', space=smem, size = 0x4, offset = 0x4, fixed_abs, tag = 'smem constant byte address 0x4 - core index']
  #allocation1 [shape = 'u32[144,128]{1,0:T(1,128)}', space=vmem, size = 0x12000, scoped, tag = 'internal scratch']
  #allocation2 [shape = 'f32[2,20,128]{2,1,0:T(8,128)}', space=vmem, size = 0x6000, scoped, tag = 'scratch operand']
  %s0 = inlined_call_operand.hbm [shape: f32[2,16,128], index: 0, kind: input, shape index: {}]
  %s1 = inlined_call_operand.hbm [shape: f32[5,640,128], index: 1, kind: input, shape index: {}]
  %s2 = inlined_call_operand.hbm [shape: f32[5,1,128], index: 2, kind: input, shape index: {}]
  %s3 = inlined_call_operand.hbm [shape: f32[5,1,128], index: 3, kind: input, shape index: {}]
  %s4 = inlined_call_operand.hbm [shape: f32[2,16,128], index: 4, kind: output, shape index: {}]
  %s5 = sld [smem:[#allocation0]]
  $region65: #{tpu_custom_call.1} parent=0
    _
  %s7 = ssub.s32 1, %s5
  %s8 = scalar_select 0, %s7, %s5
  $region1: #{tpu_custom_call.1} parent=0
    #allocation3 [shape = 'u8[16384]{0}', space=vmem, size = 0x4000, scoped, tag = 'input window, operand 0']
    #allocation4 [shape = 's32[2]{0}', space=sflag, size = 0x8, scoped, tag = 'scoped memory for tpu_custom_call.1']
    #allocation5 [shape = 's32[2]{0}', space=sflag, size = 0x8, scoped, tag = 'scoped memory for tpu_custom_call.1']
    #allocation6 [shape = 'u8[1638400]{0}', space=vmem, size = 0x190000, scoped, tag = 'input window, operand 1, single buffered']
    #allocation7 [shape = 's32[1]{0}', space=sflag, size = 0x4, scoped, tag = 'scoped memory for tpu_custom_call.1']
    #allocation8 [shape = 'u8[2560]{0}', space=vmem, size = 0xc00, scoped, tag = 'input window, operand 2, single buffered']
    #allocation9 [shape = 'u8[2560]{0}', space=vmem, size = 0xc00, scoped, tag = 'input window, operand 3, single buffered']
    #allocation10 [shape = 's32[1]{0}', space=sflag, size = 0x4, scoped, tag = 'scoped memory for tpu_custom_call.1']
    #allocation11 [shape = 'u8[16384]{0}', space=vmem, size = 0x4000, scoped, tag = 'output window, operand 0']
    %9 = vsyncpa [#allocation4], 0
    %s10 = scalar_lea.sflag [#allocation4], 1
    %11 = vsyncpa %s10, 0
    %12 = vsyncpa [#allocation7], 0
    %13 = vsyncpa [#allocation10], 0
    %14 = vsyncpa [#allocation5], 0
    %s15 = scalar_lea.sflag [#allocation5], 1
    %16 = vsyncpa %s15, 0
    loop: start=0, step=1, limit=4
    $region2: #{tpu_custom_call.1} parent=1 // loop_pre_header
      _
    $region3: #{tpu_custom_call.1} parent=1 // loop_header
      %s18 = sphi 0, %s22
      %p19 = scmp.ge.s32.totalorder %s18, 4
      %s28 = sphi 0, %s30
      %s31 = sphi 0, %s28
      %s32 = sphi 0, %s31
      %s48 = sphi 0, %s32
      %s52 = sphi 0, %s52
      %s54 = sphi 0, %s52
      %s55 = sphi 0, %s54
      %s69 = sphi 0, %s55
      %s73 = sphi 0, %s73
      %s75 = sphi 0, %s73
      %s76 = sphi 0, %s75
      %s90 = sphi 0, %s76
      %s94 = sphi 0, %s94
      %s96 = sphi 0, %s94
      %s97 = sphi 0, %s96
      %s111 = sphi 0, %s97
      %s117 = sphi 0, %s119
      %s120 = sphi 0, %s117
      %s121 = sphi 0, %s120
      %s137 = sphi 0, %s121
    $region4: #{tpu_custom_call.1} parent=1 // loop_header_branch
      %21 = sbr.rel (%p19) target = $region8
    $region5: #{tpu_custom_call.1} parent=1 // loop_body
      %s23 = ssub.s32 %s18, 1
      %s24 = ssub.s32 %s18, 2
      %s25 = sadd.s32 %s18, 1
      %s26 = ssub.s32 %s18, %s25
      %p27 = scmp.eq.s32.totalorder %s26, 0
      %s29 = sadd.s32 %s28, 1
      %s30 = scalar_select %p27, %s28, %s29
      %p33 = pneg %p27
      %p34 = scmp.eq.s32.totalorder %s18, 1
      %p35 = por %p33, %p34
      %p36 = scmp.ne.s32.totalorder %s28, %s31
      %p37 = scmp.eq.s32.totalorder %s18, 0
      %p38 = por %p36, %p37
      %p39 = scmp.ne.s32.totalorder %s28, %s31
      %p40 = scmp.eq.s32.totalorder %s23, 1
      %p41 = por %p39, %p40
      %p42 = scmp.ne.s32.totalorder %s31, %s32
      %p43 = scmp.eq.s32.totalorder %s23, 0
      %p44 = por %p42, %p43
      %p45 = scmp.ne.s32.totalorder %s31, %s32
      %p46 = scmp.eq.s32.totalorder %s24, 1
      %p47 = por %p45, %p46
      %p49 = scmp.ne.s32.totalorder %s32, %s48
      %p50 = scmp.eq.s32.totalorder %s24, 0
      %p51 = por %p49, %p50
      %s53 = sadd.s32 %s52, 1
      %p56 = scmp.eq.s32.totalorder %s18, 1
      %p57 = scmp.ne.s32.totalorder %s52, %s54
      %p58 = scmp.eq.s32.totalorder %s18, 0
      %p59 = por %p57, %p58
      %p60 = scmp.ne.s32.totalorder %s52, %s54
      %p61 = scmp.eq.s32.totalorder %s23, 1
      %p62 = por %p60, %p61
      %p63 = scmp.ne.s32.totalorder %s54, %s55
      %p64 = scmp.eq.s32.totalorder %s23, 0
      %p65 = por %p63, %p64
      %p66 = scmp.ne.s32.totalorder %s54, %s55
      %p67 = scmp.eq.s32.totalorder %s24, 1
      %p68 = por %p66, %p67
      %p70 = scmp.ne.s32.totalorder %s55, %s69
      %p71 = scmp.eq.s32.totalorder %s24, 0
      %p72 = por %p70, %p71
      %s74 = sadd.s32 %s73, 1
      %p77 = scmp.eq.s32.totalorder %s18, 1
      %p78 = scmp.ne.s32.totalorder %s73, %s75
      %p79 = scmp.eq.s32.totalorder %s18, 0
      %p80 = por %p78, %p79
      %p81 = scmp.ne.s32.totalorder %s73, %s75
      %p82 = scmp.eq.s32.totalorder %s23, 1
      %p83 = por %p81, %p82
      %p84 = scmp.ne.s32.totalorder %s75, %s76
      %p85 = scmp.eq.s32.totalorder %s23, 0
      %p86 = por %p84, %p85
      %p87 = scmp.ne.s32.totalorder %s75, %s76
      %p88 = scmp.eq.s32.totalorder %s24, 1
      %p89 = por %p87, %p88
      %p91 = scmp.ne.s32.totalorder %s76, %s90
      %p92 = scmp.eq.s32.totalorder %s24, 0
      %p93 = por %p91, %p92
      %s95 = sadd.s32 %s94, 1
      %p98 = scmp.eq.s32.totalorder %s18, 1
      %p99 = scmp.ne.s32.totalorder %s94, %s96
      %p100 = scmp.eq.s32.totalorder %s18, 0
      %p101 = por %p99, %p100
      %p102 = scmp.ne.s32.totalorder %s94, %s96
      %p103 = scmp.eq.s32.totalorder %s23, 1
      %p104 = por %p102, %p103
      %p105 = scmp.ne.s32.totalorder %s96, %s97
      %p106 = scmp.eq.s32.totalorder %s23, 0
      %p107 = por %p105, %p106
      %p108 = scmp.ne.s32.totalorder %s96, %s97
      %p109 = scmp.eq.s32.totalorder %s24, 1
      %p110 = por %p108, %p109
      %p112 = scmp.ne.s32.totalorder %s97, %s111
      %p113 = scmp.eq.s32.totalorder %s24, 0
      %p114 = por %p112, %p113
      %s115 = ssub.s32 %s18, %s25
      %p116 = scmp.eq.s32.totalorder %s115, 0
      %s118 = sadd.s32 %s117, 1
      %s119 = scalar_select %p116, %s117, %s118
      %p122 = pneg %p116
      %p123 = scmp.eq.s32.totalorder %s18, 1
      %p124 = por %p122, %p123
      %p125 = scmp.ne.s32.totalorder %s117, %s120
      %p126 = scmp.eq.s32.totalorder %s18, 0
      %p127 = por %p125, %p126
      %p128 = scmp.ne.s32.totalorder %s117, %s120
      %p129 = scmp.eq.s32.totalorder %s23, 1
      %p130 = por %p128, %p129
      %p131 = scmp.ne.s32.totalorder %s120, %s121
      %p132 = scmp.eq.s32.totalorder %s23, 0
      %p133 = por %p131, %p132
      %p134 = scmp.ne.s32.totalorder %s120, %s121
      %p135 = scmp.eq.s32.totalorder %s24, 1
      %p136 = por %p134, %p135
      %p138 = scmp.ne.s32.totalorder %s121, %s137
      %p139 = scmp.eq.s32.totalorder %s24, 0
      %p140 = por %p138, %p139
      %p141 = scmp.le.s32.totalorder 1, %s18
      %p142 = scmp.lt.s32.totalorder %s18, 3
      %p143 = pnand %p141, %p142
      %p144 = pneg %p143
      // Predicated region
      $region9: #{tpu_custom_call.1} parent=5 // pred_check
        _
      $region10: #{tpu_custom_call.1} parent=5 // pred_check_branch
        %146 = sbr.rel (%p143) target = $region12
      $region11: #{tpu_custom_call.1} parent=5 // pred_region
        %s147 = ssub.s32 %s18, 1
        // Predicated region
        $region13: #{tpu_custom_call.1} parent=11 // pred_check
          %p148 = pneg %p65
        $region14: #{tpu_custom_call.1} parent=11 // pred_check_branch
          %150 = sbr.rel (%p148) target = $region16
        $region15: #{tpu_custom_call.1} parent=11 // pred_region
          %s152 = ssub.s32 51200, 51200
          %153 = vsyncadd [#allocation7], %s152
          %s154 = sshll.u32 [#allocation6], 4
          %s155 = int_to_ptr.vmem [resolvable:$true] %s154
          %160 = dma.hbm_to_vmem [thread:$0]  %s1, 51200, %s155, [#allocation7], 128, 128, 8
        $region16: #{tpu_custom_call.1} parent=11 // pred_fallthru
          _
        // Predicated region
        $region17: #{tpu_custom_call.1} parent=11 // pred_check
          %p161 = pneg %p86
        $region18: #{tpu_custom_call.1} parent=11 // pred_check_branch
          %163 = sbr.rel (%p161) target = $region20
        $region19: #{tpu_custom_call.1} parent=11 // pred_region
          %s165 = ssub.s32 80, 80
          %166 = vsyncadd [#allocation7], %s165
          %s167 = sshll.u32 [#allocation8], 4
          %s168 = int_to_ptr.vmem [resolvable:$true] %s167
          %173 = dma.hbm_to_vmem [thread:$0]  %s2, 80, %s168, [#allocation7], 16, 16, 1
        $region20: #{tpu_custom_call.1} parent=11 // pred_fallthru
          _
        // Predicated region
        $region21: #{tpu_custom_call.1} parent=11 // pred_check
          %p174 = pneg %p107
        $region22: #{tpu_custom_call.1} parent=11 // pred_check_branch
          %176 = sbr.rel (%p174) target = $region24
        $region23: #{tpu_custom_call.1} parent=11 // pred_region
          %s178 = ssub.s32 80, 80
          %179 = vsyncadd [#allocation10], %s178
          %s180 = sshll.u32 [#allocation9], 4
          %s181 = int_to_ptr.vmem [resolvable:$true] %s180
          %186 = dma.hbm_to_vmem [thread:$0]  %s3, 80, %s181, [#allocation10], 16, 16, 1
        $region24: #{tpu_custom_call.1} parent=11 // pred_fallthru
          _
      $region12: #{tpu_custom_call.1} parent=5 // pred_fallthru
        _
      %p187 = scmp.lt.s32.totalorder %s18, 2
      // Predicated region
      $region25: #{tpu_custom_call.1} parent=5 // pred_check
        %p188 = pneg %p187
      $region26: #{tpu_custom_call.1} parent=5 // pred_check_branch
        %190 = sbr.rel (%p188) target = $region28
      $region27: #{tpu_custom_call.1} parent=5 // pred_region
        // Predicated region
        $region29: #{tpu_custom_call.1} parent=27 // pred_check
          %p191 = pneg %p38
        $region30: #{tpu_custom_call.1} parent=27 // pred_check_branch
          %193 = sbr.rel (%p191) target = $region32
        $region31: #{tpu_custom_call.1} parent=27 // pred_region
          %s194 = sand.u32 %s28, 1
          %s195 = scalar_lea.sflag [#allocation4], %s194
          %s196 = sand.u32 %s28, 1
          %s197 = smul.addr %s196, 16
          %s198 = scalar_lea.vmem [#allocation3], %s197
          %s200 = ssub.s32 256, 256
          %201 = vsyncadd %s195, %s200
          %s202 = smul.addr %s18, 2
          %s203 = smul.addr %s202, 128
          %s204 = scalar_lea.hbm %s0, %s203
          %s205 = sshll.u32 %s198, 4
          %s206 = int_to_ptr.vmem [resolvable:$true] %s205
          %211 = dma.hbm_to_vmem [thread:$0]  %s204, 256, %s206, %s195, 128, 128, 8
        $region32: #{tpu_custom_call.1} parent=27 // pred_fallthru
          _
      $region28: #{tpu_custom_call.1} parent=5 // pred_fallthru
        _
      %p212 = scmp.le.s32.totalorder 1, %s18
      %p213 = scmp.lt.s32.totalorder %s18, 3
      %p214 = pnand %p212, %p213
      %p215 = pneg %p214
      // Predicated region
      $region33: #{tpu_custom_call.1} parent=5 // pred_check
        _
      $region34: #{tpu_custom_call.1} parent=5 // pred_check_branch
        %217 = sbr.rel (%p214) target = $region36
      $region35: #{tpu_custom_call.1} parent=5 // pred_region
        %s218 = ssub.s32 %s18, 1
        %s219 = sand.u32 %s31, 1
        %s220 = scalar_lea.sflag [#allocation4], %s219
        %s221 = sand.u32 %s31, 1
        %s222 = smul.addr %s221, 16
        %s223 = scalar_lea.vmem [#allocation3], %s222
        // Predicated region
        $region37: #{tpu_custom_call.1} parent=35 // pred_check
          %p224 = pneg %p44
        $region38: #{tpu_custom_call.1} parent=35 // pred_check_branch
          %226 = sbr.rel (%p224) target = $region40
        $region39: #{tpu_custom_call.1} parent=35 // pred_region
          %227 = dma.done %s220, 256
        $region40: #{tpu_custom_call.1} parent=35 // pred_fallthru
          _
        // Predicated region
        $region41: #{tpu_custom_call.1} parent=35 // pred_check
          %p228 = pneg %p65
        $region42: #{tpu_custom_call.1} parent=35 // pred_check_branch
          %230 = sbr.rel (%p228) target = $region44
        $region43: #{tpu_custom_call.1} parent=35 // pred_region
          %231 = dma.done [#allocation7], 51200
        $region44: #{tpu_custom_call.1} parent=35 // pred_fallthru
          _
        // Predicated region
        $region45: #{tpu_custom_call.1} parent=35 // pred_check
          %p232 = pneg %p86
        $region46: #{tpu_custom_call.1} parent=35 // pred_check_branch
          %234 = sbr.rel (%p232) target = $region48
        $region47: #{tpu_custom_call.1} parent=35 // pred_region
          %235 = dma.done [#allocation7], 80
        $region48: #{tpu_custom_call.1} parent=35 // pred_fallthru
          _
        // Predicated region
        $region49: #{tpu_custom_call.1} parent=35 // pred_check
          %p236 = pneg %p107
        $region50: #{tpu_custom_call.1} parent=35 // pred_check_branch
          %238 = sbr.rel (%p236) target = $region52
        $region51: #{tpu_custom_call.1} parent=35 // pred_region
          %239 = dma.done [#allocation10], 80
        $region52: #{tpu_custom_call.1} parent=35 // pred_fallthru
          _
        %s240 = sand.u32 %s31, 1
        %s241 = scalar_lea.sflag [#allocation4], %s240
        %s242 = sand.u32 %s31, 1
        %s243 = smul.addr %s242, 16
        %s244 = scalar_lea.vmem [#allocation3], %s243
        %p245 = pneg %p44
        %p246 = pneg %p41
        %p247 = pneg %p65
        %p248 = pneg %p62
        %p249 = pneg %p86
        %p250 = pneg %p83
        %p251 = pneg %p107
        %p252 = pneg %p104
        %p253 = pneg %p133
        %p254 = pneg %p130
        %s255 = sand.u32 %s120, 1
        %s256 = scalar_lea.sflag [#allocation5], %s255
        %s257 = sand.u32 %s120, 1
        %s258 = smul.addr %s257, 16
        %s259 = scalar_lea.vmem [#allocation11], %s258
        %260 = vst [vmem:[#allocation2] sm:$0xff] 0.0
        %261 = vst [vmem:[#allocation2 + $0x8] sm:$0xff] 0.0
        %262 = vst [vmem:[#allocation2 + $0x10] sm:$0xf] 0.0
        %263 = vst [vmem:[#allocation2 + $0x18] sm:$0xff] 0.0
        %264 = vst [vmem:[#allocation2 + $0x20] sm:$0xff] 0.0
        %265 = vst [vmem:[#allocation2 + $0x28] sm:$0xf] 0.0
        %v266 = vld [vmem:[%s223] sm:$0xff]
        %v267 = vld [vmem:[%s223 + $0x8] sm:$0xff]
        %268 = vst [vmem:[#allocation2 + $0x2] sm:$0xff] %v266
        %269 = vst [vmem:[#allocation2 + $0xa] sm:$0xff] %v267
        %v270 = vld [vmem:[#allocation2] sm:$0xff]
        %v271 = vld [vmem:[#allocation2 + $0x8] sm:$0xff]
        %v272 = vld [vmem:[#allocation2 + $0x1] sm:$0xff]
        %v273 = vld [vmem:[#allocation2 + $0x9] sm:$0xff]
        %v274 = vld [vmem:[#allocation2 + $0x2] sm:$0xff]
        %v275 = vld [vmem:[#allocation2 + $0xa] sm:$0xff]
        %v276 = vld [vmem:[#allocation2 + $0x3] sm:$0xff]
        %v277 = vld [vmem:[#allocation2 + $0xb] sm:$0xff]
        %v278 = vld [vmem:[#allocation2 + $0x4] sm:$0xff]
        %v279 = vld [vmem:[#allocation2 + $0xc] sm:$0xff]
        %v280 = vld [vmem:[#allocation6] sm:$0xff]
        %v281 = vld [vmem:[#allocation6 + $0x8] sm:$0xff]
        %v282 = vld [vmem:[#allocation6 + $0x10] sm:$0xff]
        %v283 = vld [vmem:[#allocation6 + $0x18] sm:$0xff]
        %v284 = vld [vmem:[#allocation6 + $0x20] sm:$0xff]
        %v285 = vld [vmem:[#allocation6 + $0x28] sm:$0xff]
        %v286 = vld [vmem:[#allocation6 + $0x30] sm:$0xff]
        %v287 = vld [vmem:[#allocation6 + $0x38] sm:$0xff]
        %v288 = vld [vmem:[#allocation6 + $0x40] sm:$0xff]
        %v289 = vld [vmem:[#allocation6 + $0x48] sm:$0xff]
        %v290 = vld [vmem:[#allocation6 + $0x50] sm:$0xff]
        %v291 = vld [vmem:[#allocation6 + $0x58] sm:$0xff]
        %v292 = vld [vmem:[#allocation6 + $0x60] sm:$0xff]
        %v293 = vld [vmem:[#allocation6 + $0x68] sm:$0xff]
        %v294 = vld [vmem:[#allocation6 + $0x70] sm:$0xff]
        %v295 = vld [vmem:[#allocation6 + $0x78] sm:$0xff]
        %v296 = vld [vmem:[#allocation6 + $0x80] sm:$0xff]
        %v297 = vld [vmem:[#allocation6 + $0x88] sm:$0xff]
        %v298 = vld [vmem:[#allocation6 + $0x90] sm:$0xff]
        %v299 = vld [vmem:[#allocation6 + $0x98] sm:$0xff]
        %v300 = vld [vmem:[#allocation6 + $0xa0] sm:$0xff]
        %v301 = vld [vmem:[#allocation6 + $0xa8] sm:$0xff]
        %v302 = vld [vmem:[#allocation6 + $0xb0] sm:$0xff]
        %v303 = vld [vmem:[#allocation6 + $0xb8] sm:$0xff]
        %v304 = vld [vmem:[#allocation6 + $0xc0] sm:$0xff]
        %v305 = vld [vmem:[#allocation6 + $0xc8] sm:$0xff]
        %v306 = vld [vmem:[#allocation6 + $0xd0] sm:$0xff]
        %v307 = vld [vmem:[#allocation6 + $0xd8] sm:$0xff]
        %v308 = vld [vmem:[#allocation6 + $0xe0] sm:$0xff]
        %v309 = vld [vmem:[#allocation6 + $0xe8] sm:$0xff]
        %v310 = vld [vmem:[#allocation6 + $0xf0] sm:$0xff]
        %v311 = vld [vmem:[#allocation6 + $0xf8] sm:$0xff]
        %v312 = vld [vmem:[#allocation6 + $0x100] sm:$0xff]
        %v313 = vld [vmem:[#allocation6 + $0x108] sm:$0xff]
        %v314 = vld [vmem:[#allocation6 + $0x110] sm:$0xff]
        %v315 = vld [vmem:[#allocation6 + $0x118] sm:$0xff]
        %v316 = vld [vmem:[#allocation6 + $0x120] sm:$0xff]
        %v317 = vld [vmem:[#allocation6 + $0x128] sm:$0xff]
        %v318 = vld [vmem:[#allocation6 + $0x130] sm:$0xff]
        %v319 = vld [vmem:[#allocation6 + $0x138] sm:$0xff]
        %v320 = vld [vmem:[#allocation6 + $0x140] sm:$0xff]
        %v321 = vld [vmem:[#allocation6 + $0x148] sm:$0xff]
        %v322 = vld [vmem:[#allocation6 + $0x150] sm:$0xff]
        %v323 = vld [vmem:[#allocation6 + $0x158] sm:$0xff]
        %v324 = vld [vmem:[#allocation6 + $0x160] sm:$0xff]
        %v325 = vld [vmem:[#allocation6 + $0x168] sm:$0xff]
        %v326 = vld [vmem:[#allocation6 + $0x170] sm:$0xff]
        %v327 = vld [vmem:[#allocation6 + $0x178] sm:$0xff]
        %v328 = vld [vmem:[#allocation6 + $0x180] sm:$0xff]
        %v329 = vld [vmem:[#allocation6 + $0x188] sm:$0xff]
        %v330 = vld [vmem:[#allocation6 + $0x190] sm:$0xff]
        %v331 = vld [vmem:[#allocation6 + $0x198] sm:$0xff]
        %v332 = vld [vmem:[#allocation6 + $0x1a0] sm:$0xff]
        %v333 = vld [vmem:[#allocation6 + $0x1a8] sm:$0xff]
        %v334 = vld [vmem:[#allocation6 + $0x1b0] sm:$0xff]
        %v335 = vld [vmem:[#allocation6 + $0x1b8] sm:$0xff]
        %v336 = vld [vmem:[#allocation6 + $0x1c0] sm:$0xff]
        %v337 = vld [vmem:[#allocation6 + $0x1c8] sm:$0xff]
        %v338 = vld [vmem:[#allocation6 + $0x1d0] sm:$0xff]
        %v339 = vld [vmem:[#allocation6 + $0x1d8] sm:$0xff]
        %v340 = vld [vmem:[#allocation6 + $0x1e0] sm:$0xff]
        %v341 = vld [vmem:[#allocation6 + $0x1e8] sm:$0xff]
        %v342 = vld [vmem:[#allocation6 + $0x1f0] sm:$0xff]
        %v343 = vld [vmem:[#allocation6 + $0x1f8] sm:$0xff]
        %v344 = vld [vmem:[#allocation6 + $0x200] sm:$0xff]
        %v345 = vld [vmem:[#allocation6 + $0x208] sm:$0xff]
        %v346 = vld [vmem:[#allocation6 + $0x210] sm:$0xff]
        %v347 = vld [vmem:[#allocation6 + $0x218] sm:$0xff]
        %v348 = vld [vmem:[#allocation6 + $0x220] sm:$0xff]
        %v349 = vld [vmem:[#allocation6 + $0x228] sm:$0xff]
        %v350 = vld [vmem:[#allocation6 + $0x230] sm:$0xff]
        %v351 = vld [vmem:[#allocation6 + $0x238] sm:$0xff]
        %v352 = vld [vmem:[#allocation6 + $0x240] sm:$0xff]
        %v353 = vld [vmem:[#allocation6 + $0x248] sm:$0xff]
        %v354 = vld [vmem:[#allocation6 + $0x250] sm:$0xff]
        %v355 = vld [vmem:[#allocation6 + $0x258] sm:$0xff]
        %v356 = vld [vmem:[#allocation6 + $0x260] sm:$0xff]
        %v357 = vld [vmem:[#allocation6 + $0x268] sm:$0xff]
        %v358 = vld [vmem:[#allocation6 + $0x270] sm:$0xff]
        %v359 = vld [vmem:[#allocation6 + $0x278] sm:$0xff]
        %360 = vmatprep.subr.mxu0 0.0
        %361 = vmatpush1.msra.mxu0 %v280
        %362 = vmatprep.subr.mxu0 0.0
        %363 = vmatpush1.msra.mxu0 %v281
        %364 = vmatprep.subr.mxu0 0.0
        %365 = vmatpush1.msra.mxu0 %v282
        %366 = vmatprep.subr.mxu0 0.0
        %367 = vmatpush1.msra.mxu0 %v283
        %368 = vmatprep.subr.mxu0 0.0
        %369 = vmatpush1.msra.mxu0 %v284
        %370 = vmatprep.subr.mxu0 0.0
        %371 = vmatpush1.msra.mxu0 %v285
        %372 = vmatprep.subr.mxu0 0.0
        %373 = vmatpush1.msra.mxu0 %v286
        %374 = vmatprep.subr.mxu0 0.0
        %375 = vmatpush1.msra.mxu0 %v287
        %376 = vmatprep.subr.mxu0 0.0
        %377 = vmatpush1.msra.mxu0 %v288
        %378 = vmatprep.subr.mxu0 0.0
        %379 = vmatpush1.msra.mxu0 %v289
        %380 = vmatprep.subr.mxu0 0.0
        %381 = vmatpush1.msra.mxu0 %v290
        %382 = vmatprep.subr.mxu0 0.0
        %383 = vmatpush1.msra.mxu0 %v291
        %384 = vmatprep.subr.mxu0 0.0
        %385 = vmatpush1.msra.mxu0 %v292
        %386 = vmatprep.subr.mxu0 0.0
        %387 = vmatpush1.msra.mxu0 %v293
        %388 = vmatprep.subr.mxu0 0.0
        %389 = vmatpush1.msra.mxu0 %v294
        %390 = vmatprep.subr.mxu0 0.0
        %391 = vmatpush1.msra.mxu0 %v295
        %392 = vmatprep.subr.mxu0 0.0
        %393 = vmatpush1.msra.mxu0 %v296
        %394 = vmatprep.subr.mxu0 0.0
        %395 = vmatpush1.msra.mxu0 %v297
        %396 = vmatprep.subr.mxu0 0.0
        %397 = vmatpush1.msra.mxu0 %v298
        %398 = vmatprep.subr.mxu0 0.0
        %399 = vmatpush1.msra.mxu0 %v299
        %400 = vmatprep.subr.mxu0 0.0
        %401 = vmatpush1.msra.mxu0 %v300
        %402 = vmatprep.subr.mxu0 0.0
        %403 = vmatpush1.msra.mxu0 %v301
        %404 = vmatprep.subr.mxu0 0.0
        %405 = vmatpush1.msra.mxu0 %v302
        %406 = vmatprep.subr.mxu0 0.0
        %407 = vmatpush1.msra.mxu0 %v303
        %408 = vmatprep.subr.mxu0 0.0
        %409 = vmatpush1.msra.mxu0 %v304
        %410 = vmatprep.subr.mxu0 0.0
        %411 = vmatpush1.msra.mxu0 %v305
        %412 = vmatprep.subr.mxu0 0.0
        %413 = vmatpush1.msra.mxu0 %v306
        %414 = vmatprep.subr.mxu0 0.0
        %415 = vmatpush1.msra.mxu0 %v307
        %416 = vmatprep.subr.mxu0 0.0
        %417 = vmatpush1.msra.mxu0 %v308
        %418 = vmatprep.subr.mxu0 0.0
        %419 = vmatpush1.msra.mxu0 %v309
        %420 = vmatprep.subr.mxu0 0.0
        %421 = vmatpush1.msra.mxu0 %v310
        %422 = vmatprep.subr.mxu0 0.0
        %423 = vmatpush1.msra.mxu0 %v311
        %424 = vmatprep.mubr.f32.mxu0 %v272
        %425 = vmatmul.mubr.f32.gmra.mrb[0].mxu0 %v270
        %v426 = vpop.f32.mrb[0].mxu0
        %v427 = vadd.f32 0.0, %v426
        %v428 = vpop.f32.mrb[0].mxu0
        %429 = vmatprep.mubr.f32.mxu0 %v273
        %430 = vmatmul.mubr.f32.gmra.mrb[0].mxu0 %v271
        %v431 = vpop.f32.mrb[0].mxu0
        %v432 = vadd.f32 0.0, %v431
        %v433 = vpop.f32.mrb[0].mxu0
        %434 = vdwg.mxu0
        %435 = vmatprep.subr.mxu0 0.0
        %436 = vmatpush1.msra.mxu0 %v312
        %437 = vmatprep.subr.mxu0 0.0
        %438 = vmatpush1.msra.mxu0 %v313
        %439 = vmatprep.subr.mxu0 0.0
        %440 = vmatpush1.msra.mxu0 %v314
        %441 = vmatprep.subr.mxu0 0.0
        %442 = vmatpush1.msra.mxu0 %v315
        %443 = vmatprep.subr.mxu0 0.0
        %444 = vmatpush1.msra.mxu0 %v316
        %445 = vmatprep.subr.mxu0 0.0
        %446 = vmatpush1.msra.mxu0 %v317
        %447 = vmatprep.subr.mxu0 0.0
        %448 = vmatpush1.msra.mxu0 %v318
        %449 = vmatprep.subr.mxu0 0.0
        %450 = vmatpush1.msra.mxu0 %v319
        %451 = vmatprep.subr.mxu0 0.0
        %452 = vmatpush1.msra.mxu0 %v320
        %453 = vmatprep.subr.mxu0 0.0
        %454 = vmatpush1.msra.mxu0 %v321
        %455 = vmatprep.subr.mxu0 0.0
        %456 = vmatpush1.msra.mxu0 %v322
        %457 = vmatprep.subr.mxu0 0.0
        %458 = vmatpush1.msra.mxu0 %v323
        %459 = vmatprep.subr.mxu0 0.0
        %460 = vmatpush1.msra.mxu0 %v324
        %461 = vmatprep.subr.mxu0 0.0
        %462 = vmatpush1.msra.mxu0 %v325
        %463 = vmatprep.subr.mxu0 0.0
        %464 = vmatpush1.msra.mxu0 %v326
        %465 = vmatprep.subr.mxu0 0.0
        %466 = vmatpush1.msra.mxu0 %v327
        %467 = vmatprep.subr.mxu0 0.0
        %468 = vmatpush1.msra.mxu0 %v328
        %469 = vmatprep.subr.mxu0 0.0
        %470 = vmatpush1.msra.mxu0 %v329
        %471 = vmatprep.subr.mxu0 0.0
        %472 = vmatpush1.msra.mxu0 %v330
        %473 = vmatprep.subr.mxu0 0.0
        %474 = vmatpush1.msra.mxu0 %v331
        %475 = vmatprep.subr.mxu0 0.0
        %476 = vmatpush1.msra.mxu0 %v332
        %477 = vmatprep.subr.mxu0 0.0
        %478 = vmatpush1.msra.mxu0 %v333
        %479 = vmatprep.subr.mxu0 0.0
        %480 = vmatpush1.msra.mxu0 %v334
        %481 = vmatprep.subr.mxu0 0.0
        %482 = vmatpush1.msra.mxu0 %v335
        %483 = vmatprep.subr.mxu0 0.0
        %484 = vmatpush1.msra.mxu0 %v336
        %485 = vmatprep.subr.mxu0 0.0
        %486 = vmatpush1.msra.mxu0 %v337
        %487 = vmatprep.subr.mxu0 0.0
        %488 = vmatpush1.msra.mxu0 %v338
        %489 = vmatprep.subr.mxu0 0.0
        %490 = vmatpush1.msra.mxu0 %v339
        %491 = vmatprep.subr.mxu0 0.0
        %492 = vmatpush1.msra.mxu0 %v340
        %493 = vmatprep.subr.mxu0 0.0
        %494 = vmatpush1.msra.mxu0 %v341
        %495 = vmatprep.subr.mxu0 0.0
        %496 = vmatpush1.msra.mxu0 %v342
        %497 = vmatprep.subr.mxu0 0.0
        %498 = vmatpush1.msra.mxu0 %v343
        %499 = vmatprep.mubr.f32.mxu0 %v276
        %500 = vmatmul.mubr.f32.gmra.mrb[0].mxu0 %v274
        %v501 = vpop.f32.mrb[0].mxu0
        %v502 = vadd.f32 %v427, %v501
        %v503 = vpop.f32.mrb[0].mxu0
        %504 = vmatprep.mubr.f32.mxu0 %v277
        %505 = vmatmul.mubr.f32.gmra.mrb[0].mxu0 %v275
        %v506 = vpop.f32.mrb[0].mxu0
        %v507 = vadd.f32 %v432, %v506
        %v508 = vpop.f32.mrb[0].mxu0
        %509 = vdwg.mxu0
        %510 = vmatprep.subr.mxu0 0.0
        %511 = vmatpush1.msra.mxu0 %v344
        %512 = vmatprep.subr.mxu0 0.0
        %513 = vmatpush1.msra.mxu0 %v345
        %514 = vmatprep.subr.mxu0 0.0
        %515 = vmatpush1.msra.mxu0 %v346
        %516 = vmatprep.subr.mxu0 0.0
        %517 = vmatpush1.msra.mxu0 %v347
        %518 = vmatprep.subr.mxu0 0.0
        %519 = vmatpush1.msra.mxu0 %v348
        %520 = vmatprep.subr.mxu0 0.0
        %521 = vmatpush1.msra.mxu0 %v349
        %522 = vmatprep.subr.mxu0 0.0
        %523 = vmatpush1.msra.mxu0 %v350
        %524 = vmatprep.subr.mxu0 0.0
        %525 = vmatpush1.msra.mxu0 %v351
        %526 = vmatprep.subr.mxu0 0.0
        %527 = vmatpush1.msra.mxu0 %v352
        %528 = vmatprep.subr.mxu0 0.0
        %529 = vmatpush1.msra.mxu0 %v353
        %530 = vmatprep.subr.mxu0 0.0
        %531 = vmatpush1.msra.mxu0 %v354
        %532 = vmatprep.subr.mxu0 0.0
        %533 = vmatpush1.msra.mxu0 %v355
        %534 = vmatprep.subr.mxu0 0.0
        %535 = vmatpush1.msra.mxu0 %v356
        %536 = vmatprep.subr.mxu0 0.0
        %537 = vmatpush1.msra.mxu0 %v357
        %538 = vmatprep.subr.mxu0 0.0
        %539 = vmatpush1.msra.mxu0 %v358
        %540 = vmatprep.subr.mxu0 0.0
        %541 = vmatpush1.msra.mxu0 %v359
        %542 = vmatprep.subr.mxu0 0.0
        %543 = vmatpush1.msra.mxu0 0.0
        %544 = vmatprep.subr.mxu0 0.0
        %545 = vmatpush1.msra.mxu0 0.0
        %546 = vmatprep.subr.mxu0 0.0
        %547 = vmatpush1.msra.mxu0 0.0
        %548 = vmatprep.subr.mxu0 0.0
        %549 = vmatpush1.msra.mxu0 0.0
        %550 = vmatprep.subr.mxu0 0.0
        %551 = vmatpush1.msra.mxu0 0.0
        %552 = vmatprep.subr.mxu0 0.0
        %553 = vmatpush1.msra.mxu0 0.0
        %554 = vmatprep.subr.mxu0 0.0
        %555 = vmatpush1.msra.mxu0 0.0
        %556 = vmatprep.subr.mxu0 0.0
        %557 = vmatpush1.msra.mxu0 0.0
        %558 = vmatprep.subr.mxu0 0.0
        %559 = vmatpush1.msra.mxu0 0.0
        %560 = vmatprep.subr.mxu0 0.0
        %561 = vmatpush1.msra.mxu0 0.0
        %562 = vmatprep.subr.mxu0 0.0
        %563 = vmatpush1.msra.mxu0 0.0
        %564 = vmatprep.subr.mxu0 0.0
        %565 = vmatpush1.msra.mxu0 0.0
        %566 = vmatprep.subr.mxu0 0.0
        %567 = vmatpush1.msra.mxu0 0.0
        %568 = vmatprep.subr.mxu0 0.0
        %569 = vmatpush1.msra.mxu0 0.0
        %570 = vmatprep.subr.mxu0 0.0
        %571 = vmatpush1.msra.mxu0 0.0
        %572 = vmatprep.subr.mxu0 0.0
        %573 = vmatpush1.msra.mxu0 0.0
        %574 = vmatprep.mubr.f32.mxu0 0.0
        %575 = vmatmul.mubr.f32.gmra.mrb[0].mxu0 %v278
        %v576 = vpop.f32.mrb[0].mxu0
        %v577 = vadd.f32 %v502, %v576
        %v578 = vpop.f32.mrb[0].mxu0
        %579 = vmatprep.mubr.f32.mxu0 0.0
        %580 = vmatmul.mubr.f32.gmra.mrb[0].mxu0 %v279
        %v581 = vpop.f32.mrb[0].mxu0
        %v582 = vadd.f32 %v507, %v581
        %v583 = vpop.f32.mrb[0].mxu0
        %584 = vdwg.mxu0
        %v585 = vld [vmem:[#allocation8] sm:$0x1]
        %v587 = vlaneseq
        %v588 = vshrl.u32 %v587, 7
        %v589 = vsub.s32 0, %v588
        %v590 = vrot.slane %v585, %v589
        %v592 = vmul.f32 %v577, %v590
        %v593 = vmul.f32 %v582, %v590
        %v594 = vld [vmem:[#allocation9] sm:$0x1]
        %v596 = vlaneseq
        %v597 = vshrl.u32 %v596, 7
        %v598 = vsub.s32 0, %v597
        %v599 = vrot.slane %v594, %v598
        %v601 = vadd.f32 %v592, %v599
        %v602 = vadd.f32 %v593, %v599
        %v603 = vtanh.pop %v601
        %v604 = vtanh.pop %v602
        %s605 = scalar_lea.vmem [#allocation2], 24
        %606 = vst [vmem:[%s605 + $0x2] sm:$0xff] %v603
        %607 = vst [vmem:[%s605 + $0xa] sm:$0xff] %v604
        %v608 = vld [vmem:[%s605] sm:$0xff]
        %v609 = vld [vmem:[%s605 + $0x8] sm:$0xff]
        %v610 = vld [vmem:[%s605 + $0x1] sm:$0xff]
        %v611 = vld [vmem:[%s605 + $0x9] sm:$0xff]
        %v612 = vld [vmem:[%s605 + $0x2] sm:$0xff]
        %v613 = vld [vmem:[%s605 + $0xa] sm:$0xff]
        %v614 = vld [vmem:[%s605 + $0x3] sm:$0xff]
        %v615 = vld [vmem:[%s605 + $0xb] sm:$0xff]
        %v616 = vld [vmem:[%s605 + $0x4] sm:$0xff]
        %v617 = vld [vmem:[%s605 + $0xc] sm:$0xff]
        %s618 = scalar_lea.vmem [#allocation6], 640
        %v619 = vld [vmem:[%s618] sm:$0xff]
        %v620 = vld [vmem:[%s618 + $0x8] sm:$0xff]
        %v621 = vld [vmem:[%s618 + $0x10] sm:$0xff]
        %v622 = vld [vmem:[%s618 + $0x18] sm:$0xff]
        %v623 = vld [vmem:[%s618 + $0x20] sm:$0xff]
        %v624 = vld [vmem:[%s618 + $0x28] sm:$0xff]
        %v625 = vld [vmem:[%s618 + $0x30] sm:$0xff]
        %v626 = vld [vmem:[%s618 + $0x38] sm:$0xff]
        %v627 = vld [vmem:[%s618 + $0x40] sm:$0xff]
        %v628 = vld [vmem:[%s618 + $0x48] sm:$0xff]
        %v629 = vld [vmem:[%s618 + $0x50] sm:$0xff]
        %v630 = vld [vmem:[%s618 + $0x58] sm:$0xff]
        %v631 = vld [vmem:[%s618 + $0x60] sm:$0xff]
        %v632 = vld [vmem:[%s618 + $0x68] sm:$0xff]
        %v633 = vld [vmem:[%s618 + $0x70] sm:$0xff]
        %v634 = vld [vmem:[%s618 + $0x78] sm:$0xff]
        %v635 = vld [vmem:[%s618 + $0x80] sm:$0xff]
        %v636 = vld [vmem:[%s618 + $0x88] sm:$0xff]
        %v637 = vld [vmem:[%s618 + $0x90] sm:$0xff]
        %v638 = vld [vmem:[%s618 + $0x98] sm:$0xff]
        %v639 = vld [vmem:[%s618 + $0xa0] sm:$0xff]
        %v640 = vld [vmem:[%s618 + $0xa8] sm:$0xff]
        %v641 = vld [vmem:[%s618 + $0xb0] sm:$0xff]
        %v642 = vld [vmem:[%s618 + $0xb8] sm:$0xff]
        %v643 = vld [vmem:[%s618 + $0xc0] sm:$0xff]
        %v644 = vld [vmem:[%s618 + $0xc8] sm:$0xff]
        %v645 = vld [vmem:[%s618 + $0xd0] sm:$0xff]
        %v646 = vld [vmem:[%s618 + $0xd8] sm:$0xff]
        %v647 = vld [vmem:[%s618 + $0xe0] sm:$0xff]
        %v648 = vld [vmem:[%s618 + $0xe8] sm:$0xff]
        %v649 = vld [vmem:[%s618 + $0xf0] sm:$0xff]
        %v650 = vld [vmem:[%s618 + $0xf8] sm:$0xff]
        %v651 = vld [vmem:[%s618 + $0x100] sm:$0xff]
        %v652 = vld [vmem:[%s618 + $0x108] sm:$0xff]
        %v653 = vld [vmem:[%s618 + $0x110] sm:$0xff]
        %v654 = vld [vmem:[%s618 + $0x118] sm:$0xff]
        %v655 = vld [vmem:[%s618 + $0x120] sm:$0xff]
        %v656 = vld [vmem:[%s618 + $0x128] sm:$0xff]
        %v657 = vld [vmem:[%s618 + $0x130] sm:$0xff]
        %v658 = vld [vmem:[%s618 + $0x138] sm:$0xff]
        %v659 = vld [vmem:[%s618 + $0x140] sm:$0xff]
        %v660 = vld [vmem:[%s618 + $0x148] sm:$0xff]
        %v661 = vld [vmem:[%s618 + $0x150] sm:$0xff]
        %v662 = vld [vmem:[%s618 + $0x158] sm:$0xff]
        %v663 = vld [vmem:[%s618 + $0x160] sm:$0xff]
        %v664 = vld [vmem:[%s618 + $0x168] sm:$0xff]
        %v665 = vld [vmem:[%s618 + $0x170] sm:$0xff]
        %v666 = vld [vmem:[%s618 + $0x178] sm:$0xff]
        %v667 = vld [vmem:[%s618 + $0x180] sm:$0xff]
        %v668 = vld [vmem:[%s618 + $0x188] sm:$0xff]
        %v669 = vld [vmem:[%s618 + $0x190] sm:$0xff]
        %v670 = vld [vmem:[%s618 + $0x198] sm:$0xff]
        %v671 = vld [vmem:[%s618 + $0x1a0] sm:$0xff]
        %v672 = vld [vmem:[%s618 + $0x1a8] sm:$0xff]
        %v673 = vld [vmem:[%s618 + $0x1b0] sm:$0xff]
        %v674 = vld [vmem:[%s618 + $0x1b8] sm:$0xff]
        %v675 = vld [vmem:[%s618 + $0x1c0] sm:$0xff]
        %v676 = vld [vmem:[%s618 + $0x1c8] sm:$0xff]
        %v677 = vld [vmem:[%s618 + $0x1d0] sm:$0xff]
        %v678 = vld [vmem:[%s618 + $0x1d8] sm:$0xff]
        %v679 = vld [vmem:[%s618 + $0x1e0] sm:$0xff]
        %v680 = vld [vmem:[%s618 + $0x1e8] sm:$0xff]
        %v681 = vld [vmem:[%s618 + $0x1f0] sm:$0xff]
        %v682 = vld [vmem:[%s618 + $0x1f8] sm:$0xff]
        %v683 = vld [vmem:[%s618 + $0x200] sm:$0xff]
        %v684 = vld [vmem:[%s618 + $0x208] sm:$0xff]
        %v685 = vld [vmem:[%s618 + $0x210] sm:$0xff]
        %v686 = vld [vmem:[%s618 + $0x218] sm:$0xff]
        %v687 = vld [vmem:[%s618 + $0x220] sm:$0xff]
        %v688 = vld [vmem:[%s618 + $0x228] sm:$0xff]
        %v689 = vld [vmem:[%s618 + $0x230] sm:$0xff]
        %v690 = vld [vmem:[%s618 + $0x238] sm:$0xff]
        %v691 = vld [vmem:[%s618 + $0x240] sm:$0xff]
        %v692 = vld [vmem:[%s618 + $0x248] sm:$0xff]
        %v693 = vld [vmem:[%s618 + $0x250] sm:$0xff]
        %v694 = vld [vmem:[%s618 + $0x258] sm:$0xff]
        %v695 = vld [vmem:[%s618 + $0x260] sm:$0xff]
        %v696 = vld [vmem:[%s618 + $0x268] sm:$0xff]
        %v697 = vld [vmem:[%s618 + $0x270] sm:$0xff]
        %v698 = vld [vmem:[%s618 + $0x278] sm:$0xff]
        %699 = vmatprep.subr.mxu0 0.0
        %700 = vmatpush1.msra.mxu0 %v619
        %701 = vmatprep.subr.mxu0 0.0
        %702 = vmatpush1.msra.mxu0 %v620
        %703 = vmatprep.subr.mxu0 0.0
        %704 = vmatpush1.msra.mxu0 %v621
        %705 = vmatprep.subr.mxu0 0.0
        %706 = vmatpush1.msra.mxu0 %v622
        %707 = vmatprep.subr.mxu0 0.0
        %708 = vmatpush1.msra.mxu0 %v623
        %709 = vmatprep.subr.mxu0 0.0
        %710 = vmatpush1.msra.mxu0 %v624
        %711 = vmatprep.subr.mxu0 0.0
        %712 = vmatpush1.msra.mxu0 %v625
        %713 = vmatprep.subr.mxu0 0.0
        %714 = vmatpush1.msra.mxu0 %v626
        %715 = vmatprep.subr.mxu0 0.0
        %716 = vmatpush1.msra.mxu0 %v627
        %717 = vmatprep.subr.mxu0 0.0
        %718 = vmatpush1.msra.mxu0 %v628
        %719 = vmatprep.subr.mxu0 0.0
        %720 = vmatpush1.msra.mxu0 %v629
        %721 = vmatprep.subr.mxu0 0.0
        %722 = vmatpush1.msra.mxu0 %v630
        %723 = vmatprep.subr.mxu0 0.0
        %724 = vmatpush1.msra.mxu0 %v631
        %725 = vmatprep.subr.mxu0 0.0
        %726 = vmatpush1.msra.mxu0 %v632
        %727 = vmatprep.subr.mxu0 0.0
        %728 = vmatpush1.msra.mxu0 %v633
        %729 = vmatprep.subr.mxu0 0.0
        %730 = vmatpush1.msra.mxu0 %v634
        %731 = vmatprep.subr.mxu0 0.0
        %732 = vmatpush1.msra.mxu0 %v635
        %733 = vmatprep.subr.mxu0 0.0
        %734 = vmatpush1.msra.mxu0 %v636
        %735 = vmatprep.subr.mxu0 0.0
        %736 = vmatpush1.msra.mxu0 %v637
        %737 = vmatprep.subr.mxu0 0.0
        %738 = vmatpush1.msra.mxu0 %v638
        %739 = vmatprep.subr.mxu0 0.0
        %740 = vmatpush1.msra.mxu0 %v639
        %741 = vmatprep.subr.mxu0 0.0
        %742 = vmatpush1.msra.mxu0 %v640
        %743 = vmatprep.subr.mxu0 0.0
        %744 = vmatpush1.msra.mxu0 %v641
        %745 = vmatprep.subr.mxu0 0.0
        %746 = vmatpush1.msra.mxu0 %v642
        %747 = vmatprep.subr.mxu0 0.0
        %748 = vmatpush1.msra.mxu0 %v643
        %749 = vmatprep.subr.mxu0 0.0
        %750 = vmatpush1.msra.mxu0 %v644
        %751 = vmatprep.subr.mxu0 0.0
        %752 = vmatpush1.msra.mxu0 %v645
        %753 = vmatprep.subr.mxu0 0.0
        %754 = vmatpush1.msra.mxu0 %v646
        %755 = vmatprep.subr.mxu0 0.0
        %756 = vmatpush1.msra.mxu0 %v647
        %757 = vmatprep.subr.mxu0 0.0
        %758 = vmatpush1.msra.mxu0 %v648
        %759 = vmatprep.subr.mxu0 0.0
        %760 = vmatpush1.msra.mxu0 %v649
        %761 = vmatprep.subr.mxu0 0.0
        %762 = vmatpush1.msra.mxu0 %v650
        %763 = vmatprep.mubr.f32.mxu0 %v610
        %764 = vmatmul.mubr.f32.gmra.mrb[0].mxu0 %v608
        %v765 = vpop.f32.mrb[0].mxu0
        %v766 = vadd.f32 0.0, %v765
        %v767 = vpop.f32.mrb[0].mxu0
        %768 = vmatprep.mubr.f32.mxu0 %v611
        %769 = vmatmul.mubr.f32.gmra.mrb[0].mxu0 %v609
        %v770 = vpop.f32.mrb[0].mxu0
        %v771 = vadd.f32 0.0, %v770
        %v772 = vpop.f32.mrb[0].mxu0
        %773 = vdwg.mxu0
        %774 = vmatprep.subr.mxu0 0.0
        %775 = vmatpush1.msra.mxu0 %v651
        %776 = vmatprep.subr.mxu0 0.0
        %777 = vmatpush1.msra.mxu0 %v652
        %778 = vmatprep.subr.mxu0 0.0
        %779 = vmatpush1.msra.mxu0 %v653
        %780 = vmatprep.subr.mxu0 0.0
        %781 = vmatpush1.msra.mxu0 %v654
        %782 = vmatprep.subr.mxu0 0.0
        %783 = vmatpush1.msra.mxu0 %v655
        %784 = vmatprep.subr.mxu0 0.0
        %785 = vmatpush1.msra.mxu0 %v656
        %786 = vmatprep.subr.mxu0 0.0
        %787 = vmatpush1.msra.mxu0 %v657
        %788 = vmatprep.subr.mxu0 0.0
        %789 = vmatpush1.msra.mxu0 %v658
        %790 = vmatprep.subr.mxu0 0.0
        %791 = vmatpush1.msra.mxu0 %v659
        %792 = vmatprep.subr.mxu0 0.0
        %793 = vmatpush1.msra.mxu0 %v660
        %794 = vmatprep.subr.mxu0 0.0
        %795 = vmatpush1.msra.mxu0 %v661
        %796 = vmatprep.subr.mxu0 0.0
        %797 = vmatpush1.msra.mxu0 %v662
        %798 = vmatprep.subr.mxu0 0.0
        %799 = vmatpush1.msra.mxu0 %v663
        %800 = vmatprep.subr.mxu0 0.0
        %801 = vmatpush1.msra.mxu0 %v664
        %802 = vmatprep.subr.mxu0 0.0
        %803 = vmatpush1.msra.mxu0 %v665
        %804 = vmatprep.subr.mxu0 0.0
        %805 = vmatpush1.msra.mxu0 %v666
        %806 = vmatprep.subr.mxu0 0.0
        %807 = vmatpush1.msra.mxu0 %v667
        %808 = vmatprep.subr.mxu0 0.0
        %809 = vmatpush1.msra.mxu0 %v668
        %810 = vmatprep.subr.mxu0 0.0
        %811 = vmatpush1.msra.mxu0 %v669
        %812 = vmatprep.subr.mxu0 0.0
        %813 = vmatpush1.msra.mxu0 %v670
        %814 = vmatprep.subr.mxu0 0.0
        %815 = vmatpush1.msra.mxu0 %v671
        %816 = vmatprep.subr.mxu0 0.0
        %817 = vmatpush1.msra.mxu0 %v672
        %818 = vmatprep.subr.mxu0 0.0
        %819 = vmatpush1.msra.mxu0 %v673
        %820 = vmatprep.subr.mxu0 0.0
        %821 = vmatpush1.msra.mxu0 %v674
        %822 = vmatprep.subr.mxu0 0.0
        %823 = vmatpush1.msra.mxu0 %v675
        %824 = vmatprep.subr.mxu0 0.0
        %825 = vmatpush1.msra.mxu0 %v676
        %826 = vmatprep.subr.mxu0 0.0
        %827 = vmatpush1.msra.mxu0 %v677
        %828 = vmatprep.subr.mxu0 0.0
        %829 = vmatpush1.msra.mxu0 %v678
        %830 = vmatprep.subr.mxu0 0.0
        %831 = vmatpush1.msra.mxu0 %v679
        %832 = vmatprep.subr.mxu0 0.0
        %833 = vmatpush1.msra.mxu0 %v680
        %834 = vmatprep.subr.mxu0 0.0
        %835 = vmatpush1.msra.mxu0 %v681
        %836 = vmatprep.subr.mxu0 0.0
        %837 = vmatpush1.msra.mxu0 %v682
        %838 = vmatprep.mubr.f32.mxu0 %v614
        %839 = vmatmul.mubr.f32.gmra.mrb[0].mxu0 %v612
        %v840 = vpop.f32.mrb[0].mxu0
        %v841 = vadd.f32 %v766, %v840
        %v842 = vpop.f32.mrb[0].mxu0
        %843 = vmatprep.mubr.f32.mxu0 %v615
        %844 = vmatmul.mubr.f32.gmra.mrb[0].mxu0 %v613
        %v845 = vpop.f32.mrb[0].mxu0
        %v846 = vadd.f32 %v771, %v845
        %v847 = vpop.f32.mrb[0].mxu0
        %848 = vdwg.mxu0
        %849 = vmatprep.subr.mxu0 0.0
        %850 = vmatpush1.msra.mxu0 %v683
        %851 = vmatprep.subr.mxu0 0.0
        %852 = vmatpush1.msra.mxu0 %v684
        %853 = vmatprep.subr.mxu0 0.0
        %854 = vmatpush1.msra.mxu0 %v685
        %855 = vmatprep.subr.mxu0 0.0
        %856 = vmatpush1.msra.mxu0 %v686
        %857 = vmatprep.subr.mxu0 0.0
        %858 = vmatpush1.msra.mxu0 %v687
        %859 = vmatprep.subr.mxu0 0.0
        %860 = vmatpush1.msra.mxu0 %v688
        %861 = vmatprep.subr.mxu0 0.0
        %862 = vmatpush1.msra.mxu0 %v689
        %863 = vmatprep.subr.mxu0 0.0
        %864 = vmatpush1.msra.mxu0 %v690
        %865 = vmatprep.subr.mxu0 0.0
        %866 = vmatpush1.msra.mxu0 %v691
        %867 = vmatprep.subr.mxu0 0.0
        %868 = vmatpush1.msra.mxu0 %v692
        %869 = vmatprep.subr.mxu0 0.0
        %870 = vmatpush1.msra.mxu0 %v693
        %871 = vmatprep.subr.mxu0 0.0
        %872 = vmatpush1.msra.mxu0 %v694
        %873 = vmatprep.subr.mxu0 0.0
        %874 = vmatpush1.msra.mxu0 %v695
        %875 = vmatprep.subr.mxu0 0.0
        %876 = vmatpush1.msra.mxu0 %v696
        %877 = vmatprep.subr.mxu0 0.0
        %878 = vmatpush1.msra.mxu0 %v697
        %879 = vmatprep.subr.mxu0 0.0
        %880 = vmatpush1.msra.mxu0 %v698
        %881 = vmatprep.subr.mxu0 0.0
        %882 = vmatpush1.msra.mxu0 0.0
        %883 = vmatprep.subr.mxu0 0.0
        %884 = vmatpush1.msra.mxu0 0.0
        %885 = vmatprep.subr.mxu0 0.0
        %886 = vmatpush1.msra.mxu0 0.0
        %887 = vmatprep.subr.mxu0 0.0
        %888 = vmatpush1.msra.mxu0 0.0
        %889 = vmatprep.subr.mxu0 0.0
        %890 = vmatpush1.msra.mxu0 0.0
        %891 = vmatprep.subr.mxu0 0.0
        %892 = vmatpush1.msra.mxu0 0.0
        %893 = vmatprep.subr.mxu0 0.0
        %894 = vmatpush1.msra.mxu0 0.0
        %895 = vmatprep.subr.mxu0 0.0
        %896 = vmatpush1.msra.mxu0 0.0
        %897 = vmatprep.subr.mxu0 0.0
        %898 = vmatpush1.msra.mxu0 0.0
        %899 = vmatprep.subr.mxu0 0.0
        %900 = vmatpush1.msra.mxu0 0.0
        %901 = vmatprep.subr.mxu0 0.0
        %902 = vmatpush1.msra.mxu0 0.0
        %903 = vmatprep.subr.mxu0 0.0
        %904 = vmatpush1.msra.mxu0 0.0
        %905 = vmatprep.subr.mxu0 0.0
        %906 = vmatpush1.msra.mxu0 0.0
        %907 = vmatprep.subr.mxu0 0.0
        %908 = vmatpush1.msra.mxu0 0.0
        %909 = vmatprep.subr.mxu0 0.0
        %910 = vmatpush1.msra.mxu0 0.0
        %911 = vmatprep.subr.mxu0 0.0
        %912 = vmatpush1.msra.mxu0 0.0
        %913 = vmatprep.mubr.f32.mxu0 0.0
        %914 = vmatmul.mubr.f32.gmra.mrb[0].mxu0 %v616
        %v915 = vpop.f32.mrb[0].mxu0
        %v916 = vadd.f32 %v841, %v915
        %v917 = vpop.f32.mrb[0].mxu0
        %918 = vmatprep.mubr.f32.mxu0 0.0
        %919 = vmatmul.mubr.f32.gmra.mrb[0].mxu0 %v617
        %v920 = vpop.f32.mrb[0].mxu0
        %v921 = vadd.f32 %v846, %v920
        %v922 = vpop.f32.mrb[0].mxu0
        %923 = vdwg.mxu0
        %s924 = scalar_lea.vmem [#allocation8], 1
        %v925 = vld [vmem:[%s924] sm:$0x1]
        %v927 = vlaneseq
        %v928 = vshrl.u32 %v927, 7
        %v929 = vsub.s32 0, %v928
        %v930 = vrot.slane %v925, %v929
        %v932 = vmul.f32 %v916, %v930
        %v933 = vmul.f32 %v921, %v930
        %s934 = scalar_lea.vmem [#allocation9], 1
        %v935 = vld [vmem:[%s934] sm:$0x1]
        %v937 = vlaneseq
        %v938 = vshrl.u32 %v937, 7
        %v939 = vsub.s32 0, %v938
        %v940 = vrot.slane %v935, %v939
        %v942 = vadd.f32 %v932, %v940
        %v943 = vadd.f32 %v933, %v940
        %v944 = vtanh.pop %v942
        %v945 = vtanh.pop %v943
        %946 = vst [vmem:[#allocation2 + $0x2] sm:$0xff] %v944
        %947 = vst [vmem:[#allocation2 + $0xa] sm:$0xff] %v945
        %v948 = vld [vmem:[#allocation2] sm:$0xff]
        %v949 = vld [vmem:[#allocation2 + $0x8] sm:$0xff]
        %v950 = vld [vmem:[#allocation2 + $0x1] sm:$0xff]
        %v951 = vld [vmem:[#allocation2 + $0x9] sm:$0xff]
        %v952 = vld [vmem:[#allocation2 + $0x2] sm:$0xff]
        %v953 = vld [vmem:[#allocation2 + $0xa] sm:$0xff]
        %v954 = vld [vmem:[#allocation2 + $0x3] sm:$0xff]
        %v955 = vld [vmem:[#allocation2 + $0xb] sm:$0xff]
        %v956 = vld [vmem:[#allocation2 + $0x4] sm:$0xff]
        %v957 = vld [vmem:[#allocation2 + $0xc] sm:$0xff]
        %s958 = scalar_lea.vmem [#allocation6], 1280
        %v959 = vld [vmem:[%s958] sm:$0xff]
        %v960 = vld [vmem:[%s958 + $0x8] sm:$0xff]
        %v961 = vld [vmem:[%s958 + $0x10] sm:$0xff]
        %v962 = vld [vmem:[%s958 + $0x18] sm:$0xff]
        %v963 = vld [vmem:[%s958 + $0x20] sm:$0xff]
        %v964 = vld [vmem:[%s958 + $0x28] sm:$0xff]
        %v965 = vld [vmem:[%s958 + $0x30] sm:$0xff]
        %v966 = vld [vmem:[%s958 + $0x38] sm:$0xff]
        %v967 = vld [vmem:[%s958 + $0x40] sm:$0xff]
        %v968 = vld [vmem:[%s958 + $0x48] sm:$0xff]
        %v969 = vld [vmem:[%s958 + $0x50] sm:$0xff]
        %v970 = vld [vmem:[%s958 + $0x58] sm:$0xff]
        %v971 = vld [vmem:[%s958 + $0x60] sm:$0xff]
        %v972 = vld [vmem:[%s958 + $0x68] sm:$0xff]
        %v973 = vld [vmem:[%s958 + $0x70] sm:$0xff]
        %v974 = vld [vmem:[%s958 + $0x78] sm:$0xff]
        %v975 = vld [vmem:[%s958 + $0x80] sm:$0xff]
        %v976 = vld [vmem:[%s958 + $0x88] sm:$0xff]
        %v977 = vld [vmem:[%s958 + $0x90] sm:$0xff]
        %v978 = vld [vmem:[%s958 + $0x98] sm:$0xff]
        %v979 = vld [vmem:[%s958 + $0xa0] sm:$0xff]
        %v980 = vld [vmem:[%s958 + $0xa8] sm:$0xff]
        %v981 = vld [vmem:[%s958 + $0xb0] sm:$0xff]
        %v982 = vld [vmem:[%s958 + $0xb8] sm:$0xff]
        %v983 = vld [vmem:[%s958 + $0xc0] sm:$0xff]
        %v984 = vld [vmem:[%s958 + $0xc8] sm:$0xff]
        %v985 = vld [vmem:[%s958 + $0xd0] sm:$0xff]
        %v986 = vld [vmem:[%s958 + $0xd8] sm:$0xff]
        %v987 = vld [vmem:[%s958 + $0xe0] sm:$0xff]
        %v988 = vld [vmem:[%s958 + $0xe8] sm:$0xff]
        %v989 = vld [vmem:[%s958 + $0xf0] sm:$0xff]
        %v990 = vld [vmem:[%s958 + $0xf8] sm:$0xff]
        %v991 = vld [vmem:[%s958 + $0x100] sm:$0xff]
        %v992 = vld [vmem:[%s958 + $0x108] sm:$0xff]
        %v993 = vld [vmem:[%s958 + $0x110] sm:$0xff]
        %v994 = vld [vmem:[%s958 + $0x118] sm:$0xff]
        %v995 = vld [vmem:[%s958 + $0x120] sm:$0xff]
        %v996 = vld [vmem:[%s958 + $0x128] sm:$0xff]
        %v997 = vld [vmem:[%s958 + $0x130] sm:$0xff]
        %v998 = vld [vmem:[%s958 + $0x138] sm:$0xff]
        %v999 = vld [vmem:[%s958 + $0x140] sm:$0xff]
        %v1000 = vld [vmem:[%s958 + $0x148] sm:$0xff]
        %v1001 = vld [vmem:[%s958 + $0x150] sm:$0xff]
        %v1002 = vld [vmem:[%s958 + $0x158] sm:$0xff]
        %v1003 = vld [vmem:[%s958 + $0x160] sm:$0xff]
        %v1004 = vld [vmem:[%s958 + $0x168] sm:$0xff]
        %v1005 = vld [vmem:[%s958 + $0x170] sm:$0xff]
        %v1006 = vld [vmem:[%s958 + $0x178] sm:$0xff]
        %v1007 = vld [vmem:[%s958 + $0x180] sm:$0xff]
        %v1008 = vld [vmem:[%s958 + $0x188] sm:$0xff]
        %v1009 = vld [vmem:[%s958 + $0x190] sm:$0xff]
        %v1010 = vld [vmem:[%s958 + $0x198] sm:$0xff]
        %v1011 = vld [vmem:[%s958 + $0x1a0] sm:$0xff]
        %v1012 = vld [vmem:[%s958 + $0x1a8] sm:$0xff]
        %v1013 = vld [vmem:[%s958 + $0x1b0] sm:$0xff]
        %v1014 = vld [vmem:[%s958 + $0x1b8] sm:$0xff]
        %v1015 = vld [vmem:[%s958 + $0x1c0] sm:$0xff]
        %v1016 = vld [vmem:[%s958 + $0x1c8] sm:$0xff]
        %v1017 = vld [vmem:[%s958 + $0x1d0] sm:$0xff]
        %v1018 = vld [vmem:[%s958 + $0x1d8] sm:$0xff]
        %v1019 = vld [vmem:[%s958 + $0x1e0] sm:$0xff]
        %v1020 = vld [vmem:[%s958 + $0x1e8] sm:$0xff]
        %v1021 = vld [vmem:[%s958 + $0x1f0] sm:$0xff]
        %v1022 = vld [vmem:[%s958 + $0x1f8] sm:$0xff]
        %v1023 = vld [vmem:[%s958 + $0x200] sm:$0xff]
        %v1024 = vld [vmem:[%s958 + $0x208] sm:$0xff]
        %v1025 = vld [vmem:[%s958 + $0x210] sm:$0xff]
        %v1026 = vld [vmem:[%s958 + $0x218] sm:$0xff]
        %v1027 = vld [vmem:[%s958 + $0x220] sm:$0xff]
        %v1028 = vld [vmem:[%s958 + $0x228] sm:$0xff]
        %v1029 = vld [vmem:[%s958 + $0x230] sm:$0xff]
        %v1030 = vld [vmem:[%s958 + $0x238] sm:$0xff]
        %v1031 = vld [vmem:[%s958 + $0x240] sm:$0xff]
        %v1032 = vld [vmem:[%s958 + $0x248] sm:$0xff]
        %v1033 = vld [vmem:[%s958 + $0x250] sm:$0xff]
        %v1034 = vld [vmem:[%s958 + $0x258] sm:$0xff]
        %v1035 = vld [vmem:[%s958 + $0x260] sm:$0xff]
        %v1036 = vld [vmem:[%s958 + $0x268] sm:$0xff]
        %v1037 = vld [vmem:[%s958 + $0x270] sm:$0xff]
        %v1038 = vld [vmem:[%s958 + $0x278] sm:$0xff]
        %1039 = vmatprep.subr.mxu0 0.0
        %1040 = vmatpush1.msra.mxu0 %v959
        %1041 = vmatprep.subr.mxu0 0.0
        %1042 = vmatpush1.msra.mxu0 %v960
        %1043 = vmatprep.subr.mxu0 0.0
        %1044 = vmatpush1.msra.mxu0 %v961
        %1045 = vmatprep.subr.mxu0 0.0
        %1046 = vmatpush1.msra.mxu0 %v962
        %1047 = vmatprep.subr.mxu0 0.0
        %1048 = vmatpush1.msra.mxu0 %v963
        %1049 = vmatprep.subr.mxu0 0.0
        %1050 = vmatpush1.msra.mxu0 %v964
        %1051 = vmatprep.subr.mxu0 0.0
        %1052 = vmatpush1.msra.mxu0 %v965
        %1053 = vmatprep.subr.mxu0 0.0
        %1054 = vmatpush1.msra.mxu0 %v966
        %1055 = vmatprep.subr.mxu0 0.0
        %1056 = vmatpush1.msra.mxu0 %v967
        %1057 = vmatprep.subr.mxu0 0.0
        %1058 = vmatpush1.msra.mxu0 %v968
        %1059 = vmatprep.subr.mxu0 0.0
        %1060 = vmatpush1.msra.mxu0 %v969
        %1061 = vmatprep.subr.mxu0 0.0
        %1062 = vmatpush1.msra.mxu0 %v970
        %1063 = vmatprep.subr.mxu0 0.0
        %1064 = vmatpush1.msra.mxu0 %v971
        %1065 = vmatprep.subr.mxu0 0.0
        %1066 = vmatpush1.msra.mxu0 %v972
        %1067 = vmatprep.subr.mxu0 0.0
        %1068 = vmatpush1.msra.mxu0 %v973
        %1069 = vmatprep.subr.mxu0 0.0
        %1070 = vmatpush1.msra.mxu0 %v974
        %1071 = vmatprep.subr.mxu0 0.0
        %1072 = vmatpush1.msra.mxu0 %v975
        %1073 = vmatprep.subr.mxu0 0.0
        %1074 = vmatpush1.msra.mxu0 %v976
        %1075 = vmatprep.subr.mxu0 0.0
        %1076 = vmatpush1.msra.mxu0 %v977
        %1077 = vmatprep.subr.mxu0 0.0
        %1078 = vmatpush1.msra.mxu0 %v978
        %1079 = vmatprep.subr.mxu0 0.0
        %1080 = vmatpush1.msra.mxu0 %v979
        %1081 = vmatprep.subr.mxu0 0.0
        %1082 = vmatpush1.msra.mxu0 %v980
        %1083 = vmatprep.subr.mxu0 0.0
        %1084 = vmatpush1.msra.mxu0 %v981
        %1085 = vmatprep.subr.mxu0 0.0
        %1086 = vmatpush1.msra.mxu0 %v982
        %1087 = vmatprep.subr.mxu0 0.0
        %1088 = vmatpush1.msra.mxu0 %v983
        %1089 = vmatprep.subr.mxu0 0.0
        %1090 = vmatpush1.msra.mxu0 %v984
        %1091 = vmatprep.subr.mxu0 0.0
        %1092 = vmatpush1.msra.mxu0 %v985
        %1093 = vmatprep.subr.mxu0 0.0
        %1094 = vmatpush1.msra.mxu0 %v986
        %1095 = vmatprep.subr.mxu0 0.0
        %1096 = vmatpush1.msra.mxu0 %v987
        %1097 = vmatprep.subr.mxu0 0.0
        %1098 = vmatpush1.msra.mxu0 %v988
        %1099 = vmatprep.subr.mxu0 0.0
        %1100 = vmatpush1.msra.mxu0 %v989
        %1101 = vmatprep.subr.mxu0 0.0
        %1102 = vmatpush1.msra.mxu0 %v990
        %1103 = vmatprep.mubr.f32.mxu0 %v950
        %1104 = vmatmul.mubr.f32.gmra.mrb[0].mxu0 %v948
        %v1105 = vpop.f32.mrb[0].mxu0
        %v1106 = vadd.f32 0.0, %v1105
        %v1107 = vpop.f32.mrb[0].mxu0
        %1108 = vmatprep.mubr.f32.mxu0 %v951
        %1109 = vmatmul.mubr.f32.gmra.mrb[0].mxu0 %v949
        %v1110 = vpop.f32.mrb[0].mxu0
        %v1111 = vadd.f32 0.0, %v1110
        %v1112 = vpop.f32.mrb[0].mxu0
        %1113 = vdwg.mxu0
        %1114 = vmatprep.subr.mxu0 0.0
        %1115 = vmatpush1.msra.mxu0 %v991
        %1116 = vmatprep.subr.mxu0 0.0
        %1117 = vmatpush1.msra.mxu0 %v992
        %1118 = vmatprep.subr.mxu0 0.0
        %1119 = vmatpush1.msra.mxu0 %v993
        %1120 = vmatprep.subr.mxu0 0.0
        %1121 = vmatpush1.msra.mxu0 %v994
        %1122 = vmatprep.subr.mxu0 0.0
        %1123 = vmatpush1.msra.mxu0 %v995
        %1124 = vmatprep.subr.mxu0 0.0
        %1125 = vmatpush1.msra.mxu0 %v996
        %1126 = vmatprep.subr.mxu0 0.0
        %1127 = vmatpush1.msra.mxu0 %v997
        %1128 = vmatprep.subr.mxu0 0.0
        %1129 = vmatpush1.msra.mxu0 %v998
        %1130 = vmatprep.subr.mxu0 0.0
        %1131 = vmatpush1.msra.mxu0 %v999
        %1132 = vmatprep.subr.mxu0 0.0
        %1133 = vmatpush1.msra.mxu0 %v1000
        %1134 = vmatprep.subr.mxu0 0.0
        %1135 = vmatpush1.msra.mxu0 %v1001
        %1136 = vmatprep.subr.mxu0 0.0
        %1137 = vmatpush1.msra.mxu0 %v1002
        %1138 = vmatprep.subr.mxu0 0.0
        %1139 = vmatpush1.msra.mxu0 %v1003
        %1140 = vmatprep.subr.mxu0 0.0
        %1141 = vmatpush1.msra.mxu0 %v1004
        %1142 = vmatprep.subr.mxu0 0.0
        %1143 = vmatpush1.msra.mxu0 %v1005
        %1144 = vmatprep.subr.mxu0 0.0
        %1145 = vmatpush1.msra.mxu0 %v1006
        %1146 = vmatprep.subr.mxu0 0.0
        %1147 = vmatpush1.msra.mxu0 %v1007
        %1148 = vmatprep.subr.mxu0 0.0
        %1149 = vmatpush1.msra.mxu0 %v1008
        %1150 = vmatprep.subr.mxu0 0.0
        %1151 = vmatpush1.msra.mxu0 %v1009
        %1152 = vmatprep.subr.mxu0 0.0
        %1153 = vmatpush1.msra.mxu0 %v1010
        %1154 = vmatprep.subr.mxu0 0.0
        %1155 = vmatpush1.msra.mxu0 %v1011
        %1156 = vmatprep.subr.mxu0 0.0
        %1157 = vmatpush1.msra.mxu0 %v1012
        %1158 = vmatprep.subr.mxu0 0.0
        %1159 = vmatpush1.msra.mxu0 %v1013
        %1160 = vmatprep.subr.mxu0 0.0
        %1161 = vmatpush1.msra.mxu0 %v1014
        %1162 = vmatprep.subr.mxu0 0.0
        %1163 = vmatpush1.msra.mxu0 %v1015
        %1164 = vmatprep.subr.mxu0 0.0
        %1165 = vmatpush1.msra.mxu0 %v1016
        %1166 = vmatprep.subr.mxu0 0.0
        %1167 = vmatpush1.msra.mxu0 %v1017
        %1168 = vmatprep.subr.mxu0 0.0
        %1169 = vmatpush1.msra.mxu0 %v1018
        %1170 = vmatprep.subr.mxu0 0.0
        %1171 = vmatpush1.msra.mxu0 %v1019
        %1172 = vmatprep.subr.mxu0 0.0
        %1173 = vmatpush1.msra.mxu0 %v1020
        %1174 = vmatprep.subr.mxu0 0.0
        %1175 = vmatpush1.msra.mxu0 %v1021
        %1176 = vmatprep.subr.mxu0 0.0
        %1177 = vmatpush1.msra.mxu0 %v1022
        %1178 = vmatprep.mubr.f32.mxu0 %v954
        %1179 = vmatmul.mubr.f32.gmra.mrb[0].mxu0 %v952
        %v1180 = vpop.f32.mrb[0].mxu0
        %v1181 = vadd.f32 %v1106, %v1180
        %v1182 = vpop.f32.mrb[0].mxu0
        %1183 = vmatprep.mubr.f32.mxu0 %v955
        %1184 = vmatmul.mubr.f32.gmra.mrb[0].mxu0 %v953
        %v1185 = vpop.f32.mrb[0].mxu0
        %v1186 = vadd.f32 %v1111, %v1185
        %v1187 = vpop.f32.mrb[0].mxu0
        %1188 = vdwg.mxu0
        %1189 = vmatprep.subr.mxu0 0.0
        %1190 = vmatpush1.msra.mxu0 %v1023
        %1191 = vmatprep.subr.mxu0 0.0
        %1192 = vmatpush1.msra.mxu0 %v1024
        %1193 = vmatprep.subr.mxu0 0.0
        %1194 = vmatpush1.msra.mxu0 %v1025
        %1195 = vmatprep.subr.mxu0 0.0
        %1196 = vmatpush1.msra.mxu0 %v1026
        %1197 = vmatprep.subr.mxu0 0.0
        %1198 = vmatpush1.msra.mxu0 %v1027
        %1199 = vmatprep.subr.mxu0 0.0
        %1200 = vmatpush1.msra.mxu0 %v1028
        %1201 = vmatprep.subr.mxu0 0.0
        %1202 = vmatpush1.msra.mxu0 %v1029
        %1203 = vmatprep.subr.mxu0 0.0
        %1204 = vmatpush1.msra.mxu0 %v1030
        %1205 = vmatprep.subr.mxu0 0.0
        %1206 = vmatpush1.msra.mxu0 %v1031
        %1207 = vmatprep.subr.mxu0 0.0
        %1208 = vmatpush1.msra.mxu0 %v1032
        %1209 = vmatprep.subr.mxu0 0.0
        %1210 = vmatpush1.msra.mxu0 %v1033
        %1211 = vmatprep.subr.mxu0 0.0
        %1212 = vmatpush1.msra.mxu0 %v1034
        %1213 = vmatprep.subr.mxu0 0.0
        %1214 = vmatpush1.msra.mxu0 %v1035
        %1215 = vmatprep.subr.mxu0 0.0
        %1216 = vmatpush1.msra.mxu0 %v1036
        %1217 = vmatprep.subr.mxu0 0.0
        %1218 = vmatpush1.msra.mxu0 %v1037
        %1219 = vmatprep.subr.mxu0 0.0
        %1220 = vmatpush1.msra.mxu0 %v1038
        %1221 = vmatprep.subr.mxu0 0.0
        %1222 = vmatpush1.msra.mxu0 0.0
        %1223 = vmatprep.subr.mxu0 0.0
        %1224 = vmatpush1.msra.mxu0 0.0
        %1225 = vmatprep.subr.mxu0 0.0
        %1226 = vmatpush1.msra.mxu0 0.0
        %1227 = vmatprep.subr.mxu0 0.0
        %1228 = vmatpush1.msra.mxu0 0.0
        %1229 = vmatprep.subr.mxu0 0.0
        %1230 = vmatpush1.msra.mxu0 0.0
        %1231 = vmatprep.subr.mxu0 0.0
        %1232 = vmatpush1.msra.mxu0 0.0
        %1233 = vmatprep.subr.mxu0 0.0
        %1234 = vmatpush1.msra.mxu0 0.0
        %1235 = vmatprep.subr.mxu0 0.0
        %1236 = vmatpush1.msra.mxu0 0.0
        %1237 = vmatprep.subr.mxu0 0.0
        %1238 = vmatpush1.msra.mxu0 0.0
        %1239 = vmatprep.subr.mxu0 0.0
        %1240 = vmatpush1.msra.mxu0 0.0
        %1241 = vmatprep.subr.mxu0 0.0
        %1242 = vmatpush1.msra.mxu0 0.0
        %1243 = vmatprep.subr.mxu0 0.0
        %1244 = vmatpush1.msra.mxu0 0.0
        %1245 = vmatprep.subr.mxu0 0.0
        %1246 = vmatpush1.msra.mxu0 0.0
        %1247 = vmatprep.subr.mxu0 0.0
        %1248 = vmatpush1.msra.mxu0 0.0
        %1249 = vmatprep.subr.mxu0 0.0
        %1250 = vmatpush1.msra.mxu0 0.0
        %1251 = vmatprep.subr.mxu0 0.0
        %1252 = vmatpush1.msra.mxu0 0.0
        %1253 = vmatprep.mubr.f32.mxu0 0.0
        %1254 = vmatmul.mubr.f32.gmra.mrb[0].mxu0 %v956
        %v1255 = vpop.f32.mrb[0].mxu0
        %v1256 = vadd.f32 %v1181, %v1255
        %v1257 = vpop.f32.mrb[0].mxu0
        %1258 = vmatprep.mubr.f32.mxu0 0.0
        %1259 = vmatmul.mubr.f32.gmra.mrb[0].mxu0 %v957
        %v1260 = vpop.f32.mrb[0].mxu0
        %v1261 = vadd.f32 %v1186, %v1260
        %v1262 = vpop.f32.mrb[0].mxu0
        %1263 = vdwg.mxu0
        %s1264 = scalar_lea.vmem [#allocation8], 2
        %v1265 = vld [vmem:[%s1264] sm:$0x1]
        %v1267 = vlaneseq
        %v1268 = vshrl.u32 %v1267, 7
        %v1269 = vsub.s32 0, %v1268
        %v1270 = vrot.slane %v1265, %v1269
        %v1272 = vmul.f32 %v1256, %v1270
        %v1273 = vmul.f32 %v1261, %v1270
        %s1274 = scalar_lea.vmem [#allocation9], 2
        %v1275 = vld [vmem:[%s1274] sm:$0x1]
        %v1277 = vlaneseq
        %v1278 = vshrl.u32 %v1277, 7
        %v1279 = vsub.s32 0, %v1278
        %v1280 = vrot.slane %v1275, %v1279
        %v1282 = vadd.f32 %v1272, %v1280
        %v1283 = vadd.f32 %v1273, %v1280
        %v1284 = vtanh.pop %v1282
        %v1285 = vtanh.pop %v1283
        %1286 = vst [vmem:[%s605 + $0x2] sm:$0xff] %v1284
        %1287 = vst [vmem:[%s605 + $0xa] sm:$0xff] %v1285
        %v1288 = vld [vmem:[%s605] sm:$0xff]
        %v1289 = vld [vmem:[%s605 + $0x8] sm:$0xff]
        %v1290 = vld [vmem:[%s605 + $0x1] sm:$0xff]
        %v1291 = vld [vmem:[%s605 + $0x9] sm:$0xff]
        %v1292 = vld [vmem:[%s605 + $0x2] sm:$0xff]
        %v1293 = vld [vmem:[%s605 + $0xa] sm:$0xff]
        %v1294 = vld [vmem:[%s605 + $0x3] sm:$0xff]
        %v1295 = vld [vmem:[%s605 + $0xb] sm:$0xff]
        %v1296 = vld [vmem:[%s605 + $0x4] sm:$0xff]
        %v1297 = vld [vmem:[%s605 + $0xc] sm:$0xff]
        %s1298 = scalar_lea.vmem [#allocation6], 1920
        %v1299 = vld [vmem:[%s1298] sm:$0xff]
        %v1300 = vld [vmem:[%s1298 + $0x8] sm:$0xff]
        %v1301 = vld [vmem:[%s1298 + $0x10] sm:$0xff]
        %v1302 = vld [vmem:[%s1298 + $0x18] sm:$0xff]
        %v1303 = vld [vmem:[%s1298 + $0x20] sm:$0xff]
        %v1304 = vld [vmem:[%s1298 + $0x28] sm:$0xff]
        %v1305 = vld [vmem:[%s1298 + $0x30] sm:$0xff]
        %v1306 = vld [vmem:[%s1298 + $0x38] sm:$0xff]
        %v1307 = vld [vmem:[%s1298 + $0x40] sm:$0xff]
        %v1308 = vld [vmem:[%s1298 + $0x48] sm:$0xff]
        %v1309 = vld [vmem:[%s1298 + $0x50] sm:$0xff]
        %v1310 = vld [vmem:[%s1298 + $0x58] sm:$0xff]
        %v1311 = vld [vmem:[%s1298 + $0x60] sm:$0xff]
        %v1312 = vld [vmem:[%s1298 + $0x68] sm:$0xff]
        %v1313 = vld [vmem:[%s1298 + $0x70] sm:$0xff]
        %v1314 = vld [vmem:[%s1298 + $0x78] sm:$0xff]
        %v1315 = vld [vmem:[%s1298 + $0x80] sm:$0xff]
        %v1316 = vld [vmem:[%s1298 + $0x88] sm:$0xff]
        %v1317 = vld [vmem:[%s1298 + $0x90] sm:$0xff]
        %v1318 = vld [vmem:[%s1298 + $0x98] sm:$0xff]
        %v1319 = vld [vmem:[%s1298 + $0xa0] sm:$0xff]
        %v1320 = vld [vmem:[%s1298 + $0xa8] sm:$0xff]
        %v1321 = vld [vmem:[%s1298 + $0xb0] sm:$0xff]
        %v1322 = vld [vmem:[%s1298 + $0xb8] sm:$0xff]
        %v1323 = vld [vmem:[%s1298 + $0xc0] sm:$0xff]
        %v1324 = vld [vmem:[%s1298 + $0xc8] sm:$0xff]
        %v1325 = vld [vmem:[%s1298 + $0xd0] sm:$0xff]
        %v1326 = vld [vmem:[%s1298 + $0xd8] sm:$0xff]
        %v1327 = vld [vmem:[%s1298 + $0xe0] sm:$0xff]
        %v1328 = vld [vmem:[%s1298 + $0xe8] sm:$0xff]
        %v1329 = vld [vmem:[%s1298 + $0xf0] sm:$0xff]
        %v1330 = vld [vmem:[%s1298 + $0xf8] sm:$0xff]
        %v1331 = vld [vmem:[%s1298 + $0x100] sm:$0xff]
        %v1332 = vld [vmem:[%s1298 + $0x108] sm:$0xff]
        %v1333 = vld [vmem:[%s1298 + $0x110] sm:$0xff]
        %v1334 = vld [vmem:[%s1298 + $0x118] sm:$0xff]
        %v1335 = vld [vmem:[%s1298 + $0x120] sm:$0xff]
        %v1336 = vld [vmem:[%s1298 + $0x128] sm:$0xff]
        %v1337 = vld [vmem:[%s1298 + $0x130] sm:$0xff]
        %v1338 = vld [vmem:[%s1298 + $0x138] sm:$0xff]
        %v1339 = vld [vmem:[%s1298 + $0x140] sm:$0xff]
        %v1340 = vld [vmem:[%s1298 + $0x148] sm:$0xff]
        %v1341 = vld [vmem:[%s1298 + $0x150] sm:$0xff]
        %v1342 = vld [vmem:[%s1298 + $0x158] sm:$0xff]
        %v1343 = vld [vmem:[%s1298 + $0x160] sm:$0xff]
        %v1344 = vld [vmem:[%s1298 + $0x168] sm:$0xff]
        %v1345 = vld [vmem:[%s1298 + $0x170] sm:$0xff]
        %v1346 = vld [vmem:[%s1298 + $0x178] sm:$0xff]
        %v1347 = vld [vmem:[%s1298 + $0x180] sm:$0xff]
        %v1348 = vld [vmem:[%s1298 + $0x188] sm:$0xff]
        %v1349 = vld [vmem:[%s1298 + $0x190] sm:$0xff]
        %v1350 = vld [vmem:[%s1298 + $0x198] sm:$0xff]
        %v1351 = vld [vmem:[%s1298 + $0x1a0] sm:$0xff]
        %v1352 = vld [vmem:[%s1298 + $0x1a8] sm:$0xff]
        %v1353 = vld [vmem:[%s1298 + $0x1b0] sm:$0xff]
        %v1354 = vld [vmem:[%s1298 + $0x1b8] sm:$0xff]
        %v1355 = vld [vmem:[%s1298 + $0x1c0] sm:$0xff]
        %v1356 = vld [vmem:[%s1298 + $0x1c8] sm:$0xff]
        %v1357 = vld [vmem:[%s1298 + $0x1d0] sm:$0xff]
        %v1358 = vld [vmem:[%s1298 + $0x1d8] sm:$0xff]
        %v1359 = vld [vmem:[%s1298 + $0x1e0] sm:$0xff]
        %v1360 = vld [vmem:[%s1298 + $0x1e8] sm:$0xff]
        %v1361 = vld [vmem:[%s1298 + $0x1f0] sm:$0xff]
        %v1362 = vld [vmem:[%s1298 + $0x1f8] sm:$0xff]
        %v1363 = vld [vmem:[%s1298 + $0x200] sm:$0xff]
        %v1364 = vld [vmem:[%s1298 + $0x208] sm:$0xff]
        %v1365 = vld [vmem:[%s1298 + $0x210] sm:$0xff]
        %v1366 = vld [vmem:[%s1298 + $0x218] sm:$0xff]
        %v1367 = vld [vmem:[%s1298 + $0x220] sm:$0xff]
        %v1368 = vld [vmem:[%s1298 + $0x228] sm:$0xff]
        %v1369 = vld [vmem:[%s1298 + $0x230] sm:$0xff]
        %v1370 = vld [vmem:[%s1298 + $0x238] sm:$0xff]
        %v1371 = vld [vmem:[%s1298 + $0x240] sm:$0xff]
        %v1372 = vld [vmem:[%s1298 + $0x248] sm:$0xff]
        %v1373 = vld [vmem:[%s1298 + $0x250] sm:$0xff]
        %v1374 = vld [vmem:[%s1298 + $0x258] sm:$0xff]
        %v1375 = vld [vmem:[%s1298 + $0x260] sm:$0xff]
        %v1376 = vld [vmem:[%s1298 + $0x268] sm:$0xff]
        %v1377 = vld [vmem:[%s1298 + $0x270] sm:$0xff]
        %v1378 = vld [vmem:[%s1298 + $0x278] sm:$0xff]
        %1379 = vmatprep.subr.mxu0 0.0
        %1380 = vmatpush1.msra.mxu0 %v1299
        %1381 = vmatprep.subr.mxu0 0.0
        %1382 = vmatpush1.msra.mxu0 %v1300
        %1383 = vmatprep.subr.mxu0 0.0
        %1384 = vmatpush1.msra.mxu0 %v1301
        %1385 = vmatprep.subr.mxu0 0.0
        %1386 = vmatpush1.msra.mxu0 %v1302
        %1387 = vmatprep.subr.mxu0 0.0
        %1388 = vmatpush1.msra.mxu0 %v1303
        %1389 = vmatprep.subr.mxu0 0.0
        %1390 = vmatpush1.msra.mxu0 %v1304
        %1391 = vmatprep.subr.mxu0 0.0
        %1392 = vmatpush1.msra.mxu0 %v1305
        %1393 = vmatprep.subr.mxu0 0.0
        %1394 = vmatpush1.msra.mxu0 %v1306
        %1395 = vmatprep.subr.mxu0 0.0
        %1396 = vmatpush1.msra.mxu0 %v1307
        %1397 = vmatprep.subr.mxu0 0.0
        %1398 = vmatpush1.msra.mxu0 %v1308
        %1399 = vmatprep.subr.mxu0 0.0
        %1400 = vmatpush1.msra.mxu0 %v1309
        %1401 = vmatprep.subr.mxu0 0.0
        %1402 = vmatpush1.msra.mxu0 %v1310
        %1403 = vmatprep.subr.mxu0 0.0
        %1404 = vmatpush1.msra.mxu0 %v1311
        %1405 = vmatprep.subr.mxu0 0.0
        %1406 = vmatpush1.msra.mxu0 %v1312
        %1407 = vmatprep.subr.mxu0 0.0
        %1408 = vmatpush1.msra.mxu0 %v1313
        %1409 = vmatprep.subr.mxu0 0.0
        %1410 = vmatpush1.msra.mxu0 %v1314
        %1411 = vmatprep.subr.mxu0 0.0
        %1412 = vmatpush1.msra.mxu0 %v1315
        %1413 = vmatprep.subr.mxu0 0.0
        %1414 = vmatpush1.msra.mxu0 %v1316
        %1415 = vmatprep.subr.mxu0 0.0
        %1416 = vmatpush1.msra.mxu0 %v1317
        %1417 = vmatprep.subr.mxu0 0.0
        %1418 = vmatpush1.msra.mxu0 %v1318
        %1419 = vmatprep.subr.mxu0 0.0
        %1420 = vmatpush1.msra.mxu0 %v1319
        %1421 = vmatprep.subr.mxu0 0.0
        %1422 = vmatpush1.msra.mxu0 %v1320
        %1423 = vmatprep.subr.mxu0 0.0
        %1424 = vmatpush1.msra.mxu0 %v1321
        %1425 = vmatprep.subr.mxu0 0.0
        %1426 = vmatpush1.msra.mxu0 %v1322
        %1427 = vmatprep.subr.mxu0 0.0
        %1428 = vmatpush1.msra.mxu0 %v1323
        %1429 = vmatprep.subr.mxu0 0.0
        %1430 = vmatpush1.msra.mxu0 %v1324
        %1431 = vmatprep.subr.mxu0 0.0
        %1432 = vmatpush1.msra.mxu0 %v1325
        %1433 = vmatprep.subr.mxu0 0.0
        %1434 = vmatpush1.msra.mxu0 %v1326
        %1435 = vmatprep.subr.mxu0 0.0
        %1436 = vmatpush1.msra.mxu0 %v1327
        %1437 = vmatprep.subr.mxu0 0.0
        %1438 = vmatpush1.msra.mxu0 %v1328
        %1439 = vmatprep.subr.mxu0 0.0
        %1440 = vmatpush1.msra.mxu0 %v1329
        %1441 = vmatprep.subr.mxu0 0.0
        %1442 = vmatpush1.msra.mxu0 %v1330
        %1443 = vmatprep.mubr.f32.mxu0 %v1290
        %1444 = vmatmul.mubr.f32.gmra.mrb[0].mxu0 %v1288
        %v1445 = vpop.f32.mrb[0].mxu0
        %v1446 = vadd.f32 0.0, %v1445
        %v1447 = vpop.f32.mrb[0].mxu0
        %1448 = vmatprep.mubr.f32.mxu0 %v1291
        %1449 = vmatmul.mubr.f32.gmra.mrb[0].mxu0 %v1289
        %v1450 = vpop.f32.mrb[0].mxu0
        %v1451 = vadd.f32 0.0, %v1450
        %v1452 = vpop.f32.mrb[0].mxu0
        %1453 = vdwg.mxu0
        %1454 = vmatprep.subr.mxu0 0.0
        %1455 = vmatpush1.msra.mxu0 %v1331
        %1456 = vmatprep.subr.mxu0 0.0
        %1457 = vmatpush1.msra.mxu0 %v1332
        %1458 = vmatprep.subr.mxu0 0.0
        %1459 = vmatpush1.msra.mxu0 %v1333
        %1460 = vmatprep.subr.mxu0 0.0
        %1461 = vmatpush1.msra.mxu0 %v1334
        %1462 = vmatprep.subr.mxu0 0.0
        %1463 = vmatpush1.msra.mxu0 %v1335
        %1464 = vmatprep.subr.mxu0 0.0
        %1465 = vmatpush1.msra.mxu0 %v1336
        %1466 = vmatprep.subr.mxu0 0.0
        %1467 = vmatpush1.msra.mxu0 %v1337
        %1468 = vmatprep.subr.mxu0 0.0
        %1469 = vmatpush1.msra.mxu0 %v1338
        %1470 = vmatprep.subr.mxu0 0.0
        %1471 = vmatpush1.msra.mxu0 %v1339
        %1472 = vmatprep.subr.mxu0 0.0
        %1473 = vmatpush1.msra.mxu0 %v1340
        %1474 = vmatprep.subr.mxu0 0.0
        %1475 = vmatpush1.msra.mxu0 %v1341
        %1476 = vmatprep.subr.mxu0 0.0
        %1477 = vmatpush1.msra.mxu0 %v1342
        %1478 = vmatprep.subr.mxu0 0.0
        %1479 = vmatpush1.msra.mxu0 %v1343
        %1480 = vmatprep.subr.mxu0 0.0
        %1481 = vmatpush1.msra.mxu0 %v1344
        %1482 = vmatprep.subr.mxu0 0.0
        %1483 = vmatpush1.msra.mxu0 %v1345
        %1484 = vmatprep.subr.mxu0 0.0
        %1485 = vmatpush1.msra.mxu0 %v1346
        %1486 = vmatprep.subr.mxu0 0.0
        %1487 = vmatpush1.msra.mxu0 %v1347
        %1488 = vmatprep.subr.mxu0 0.0
        %1489 = vmatpush1.msra.mxu0 %v1348
        %1490 = vmatprep.subr.mxu0 0.0
        %1491 = vmatpush1.msra.mxu0 %v1349
        %1492 = vmatprep.subr.mxu0 0.0
        %1493 = vmatpush1.msra.mxu0 %v1350
        %1494 = vmatprep.subr.mxu0 0.0
        %1495 = vmatpush1.msra.mxu0 %v1351
        %1496 = vmatprep.subr.mxu0 0.0
        %1497 = vmatpush1.msra.mxu0 %v1352
        %1498 = vmatprep.subr.mxu0 0.0
        %1499 = vmatpush1.msra.mxu0 %v1353
        %1500 = vmatprep.subr.mxu0 0.0
        %1501 = vmatpush1.msra.mxu0 %v1354
        %1502 = vmatprep.subr.mxu0 0.0
        %1503 = vmatpush1.msra.mxu0 %v1355
        %1504 = vmatprep.subr.mxu0 0.0
        %1505 = vmatpush1.msra.mxu0 %v1356
        %1506 = vmatprep.subr.mxu0 0.0
        %1507 = vmatpush1.msra.mxu0 %v1357
        %1508 = vmatprep.subr.mxu0 0.0
        %1509 = vmatpush1.msra.mxu0 %v1358
        %1510 = vmatprep.subr.mxu0 0.0
        %1511 = vmatpush1.msra.mxu0 %v1359
        %1512 = vmatprep.subr.mxu0 0.0
        %1513 = vmatpush1.msra.mxu0 %v1360
        %1514 = vmatprep.subr.mxu0 0.0
        %1515 = vmatpush1.msra.mxu0 %v1361
        %1516 = vmatprep.subr.mxu0 0.0
        %1517 = vmatpush1.msra.mxu0 %v1362
        %1518 = vmatprep.mubr.f32.mxu0 %v1294
        %1519 = vmatmul.mubr.f32.gmra.mrb[0].mxu0 %v1292
        %v1520 = vpop.f32.mrb[0].mxu0
        %v1521 = vadd.f32 %v1446, %v1520
        %v1522 = vpop.f32.mrb[0].mxu0
        %1523 = vmatprep.mubr.f32.mxu0 %v1295
        %1524 = vmatmul.mubr.f32.gmra.mrb[0].mxu0 %v1293
        %v1525 = vpop.f32.mrb[0].mxu0
        %v1526 = vadd.f32 %v1451, %v1525
        %v1527 = vpop.f32.mrb[0].mxu0
        %1528 = vdwg.mxu0
        %1529 = vmatprep.subr.mxu0 0.0
        %1530 = vmatpush1.msra.mxu0 %v1363
        %1531 = vmatprep.subr.mxu0 0.0
        %1532 = vmatpush1.msra.mxu0 %v1364
        %1533 = vmatprep.subr.mxu0 0.0
        %1534 = vmatpush1.msra.mxu0 %v1365
        %1535 = vmatprep.subr.mxu0 0.0
        %1536 = vmatpush1.msra.mxu0 %v1366
        %1537 = vmatprep.subr.mxu0 0.0
        %1538 = vmatpush1.msra.mxu0 %v1367
        %1539 = vmatprep.subr.mxu0 0.0
        %1540 = vmatpush1.msra.mxu0 %v1368
        %1541 = vmatprep.subr.mxu0 0.0
        %1542 = vmatpush1.msra.mxu0 %v1369
        %1543 = vmatprep.subr.mxu0 0.0
        %1544 = vmatpush1.msra.mxu0 %v1370
        %1545 = vmatprep.subr.mxu0 0.0
        %1546 = vmatpush1.msra.mxu0 %v1371
        %1547 = vmatprep.subr.mxu0 0.0
        %1548 = vmatpush1.msra.mxu0 %v1372
        %1549 = vmatprep.subr.mxu0 0.0
        %1550 = vmatpush1.msra.mxu0 %v1373
        %1551 = vmatprep.subr.mxu0 0.0
        %1552 = vmatpush1.msra.mxu0 %v1374
        %1553 = vmatprep.subr.mxu0 0.0
        %1554 = vmatpush1.msra.mxu0 %v1375
        %1555 = vmatprep.subr.mxu0 0.0
        %1556 = vmatpush1.msra.mxu0 %v1376
        %1557 = vmatprep.subr.mxu0 0.0
        %1558 = vmatpush1.msra.mxu0 %v1377
        %1559 = vmatprep.subr.mxu0 0.0
        %1560 = vmatpush1.msra.mxu0 %v1378
        %1561 = vmatprep.subr.mxu0 0.0
        %1562 = vmatpush1.msra.mxu0 0.0
        %1563 = vmatprep.subr.mxu0 0.0
        %1564 = vmatpush1.msra.mxu0 0.0
        %1565 = vmatprep.subr.mxu0 0.0
        %1566 = vmatpush1.msra.mxu0 0.0
        %1567 = vmatprep.subr.mxu0 0.0
        %1568 = vmatpush1.msra.mxu0 0.0
        %1569 = vmatprep.subr.mxu0 0.0
        %1570 = vmatpush1.msra.mxu0 0.0
        %1571 = vmatprep.subr.mxu0 0.0
        %1572 = vmatpush1.msra.mxu0 0.0
        %1573 = vmatprep.subr.mxu0 0.0
        %1574 = vmatpush1.msra.mxu0 0.0
        %1575 = vmatprep.subr.mxu0 0.0
        %1576 = vmatpush1.msra.mxu0 0.0
        %1577 = vmatprep.subr.mxu0 0.0
        %1578 = vmatpush1.msra.mxu0 0.0
        %1579 = vmatprep.subr.mxu0 0.0
        %1580 = vmatpush1.msra.mxu0 0.0
        %1581 = vmatprep.subr.mxu0 0.0
        %1582 = vmatpush1.msra.mxu0 0.0
        %1583 = vmatprep.subr.mxu0 0.0
        %1584 = vmatpush1.msra.mxu0 0.0
        %1585 = vmatprep.subr.mxu0 0.0
        %1586 = vmatpush1.msra.mxu0 0.0
        %1587 = vmatprep.subr.mxu0 0.0
        %1588 = vmatpush1.msra.mxu0 0.0
        %1589 = vmatprep.subr.mxu0 0.0
        %1590 = vmatpush1.msra.mxu0 0.0
        %1591 = vmatprep.subr.mxu0 0.0
        %1592 = vmatpush1.msra.mxu0 0.0
        %1593 = vmatprep.mubr.f32.mxu0 0.0
        %1594 = vmatmul.mubr.f32.gmra.mrb[0].mxu0 %v1296
        %v1595 = vpop.f32.mrb[0].mxu0
        %v1596 = vadd.f32 %v1521, %v1595
        %v1597 = vpop.f32.mrb[0].mxu0
        %1598 = vmatprep.mubr.f32.mxu0 0.0
        %1599 = vmatmul.mubr.f32.gmra.mrb[0].mxu0 %v1297
        %v1600 = vpop.f32.mrb[0].mxu0
        %v1601 = vadd.f32 %v1526, %v1600
        %v1602 = vpop.f32.mrb[0].mxu0
        %1603 = vdwg.mxu0
        %s1604 = scalar_lea.vmem [#allocation8], 3
        %v1605 = vld [vmem:[%s1604] sm:$0x1]
        %v1607 = vlaneseq
        %v1608 = vshrl.u32 %v1607, 7
        %v1609 = vsub.s32 0, %v1608
        %v1610 = vrot.slane %v1605, %v1609
        %v1612 = vmul.f32 %v1596, %v1610
        %v1613 = vmul.f32 %v1601, %v1610
        %s1614 = scalar_lea.vmem [#allocation9], 3
        %v1615 = vld [vmem:[%s1614] sm:$0x1]
        %v1617 = vlaneseq
        %v1618 = vshrl.u32 %v1617, 7
        %v1619 = vsub.s32 0, %v1618
        %v1620 = vrot.slane %v1615, %v1619
        %v1622 = vadd.f32 %v1612, %v1620
        %v1623 = vadd.f32 %v1613, %v1620
        %v1624 = vtanh.pop %v1622
        %v1625 = vtanh.pop %v1623
        %1626 = vst [vmem:[#allocation2 + $0x2] sm:$0xff] %v1624
        %1627 = vst [vmem:[#allocation2 + $0xa] sm:$0xff] %v1625
        %v1628 = vld [vmem:[#allocation2] sm:$0xff]
        %v1629 = vld [vmem:[#allocation2 + $0x8] sm:$0xff]
        %v1630 = vld [vmem:[#allocation2 + $0x1] sm:$0xff]
        %v1631 = vld [vmem:[#allocation2 + $0x9] sm:$0xff]
        %v1632 = vld [vmem:[#allocation2 + $0x2] sm:$0xff]
        %v1633 = vld [vmem:[#allocation2 + $0xa] sm:$0xff]
        %v1634 = vld [vmem:[#allocation2 + $0x3] sm:$0xff]
        %v1635 = vld [vmem:[#allocation2 + $0xb] sm:$0xff]
        %v1636 = vld [vmem:[#allocation2 + $0x4] sm:$0xff]
        %v1637 = vld [vmem:[#allocation2 + $0xc] sm:$0xff]
        %s1638 = scalar_lea.vmem [#allocation6], 2560
        %v1639 = vld [vmem:[%s1638] sm:$0xff]
        %v1640 = vld [vmem:[%s1638 + $0x8] sm:$0xff]
        %v1641 = vld [vmem:[%s1638 + $0x10] sm:$0xff]
        %v1642 = vld [vmem:[%s1638 + $0x18] sm:$0xff]
        %v1643 = vld [vmem:[%s1638 + $0x20] sm:$0xff]
        %v1644 = vld [vmem:[%s1638 + $0x28] sm:$0xff]
        %v1645 = vld [vmem:[%s1638 + $0x30] sm:$0xff]
        %v1646 = vld [vmem:[%s1638 + $0x38] sm:$0xff]
        %v1647 = vld [vmem:[%s1638 + $0x40] sm:$0xff]
        %v1648 = vld [vmem:[%s1638 + $0x48] sm:$0xff]
        %v1649 = vld [vmem:[%s1638 + $0x50] sm:$0xff]
        %v1650 = vld [vmem:[%s1638 + $0x58] sm:$0xff]
        %v1651 = vld [vmem:[%s1638 + $0x60] sm:$0xff]
        %v1652 = vld [vmem:[%s1638 + $0x68] sm:$0xff]
        %v1653 = vld [vmem:[%s1638 + $0x70] sm:$0xff]
        %v1654 = vld [vmem:[%s1638 + $0x78] sm:$0xff]
        %v1655 = vld [vmem:[%s1638 + $0x80] sm:$0xff]
        %v1656 = vld [vmem:[%s1638 + $0x88] sm:$0xff]
        %v1657 = vld [vmem:[%s1638 + $0x90] sm:$0xff]
        %v1658 = vld [vmem:[%s1638 + $0x98] sm:$0xff]
        %v1659 = vld [vmem:[%s1638 + $0xa0] sm:$0xff]
        %v1660 = vld [vmem:[%s1638 + $0xa8] sm:$0xff]
        %v1661 = vld [vmem:[%s1638 + $0xb0] sm:$0xff]
        %v1662 = vld [vmem:[%s1638 + $0xb8] sm:$0xff]
        %v1663 = vld [vmem:[%s1638 + $0xc0] sm:$0xff]
        %v1664 = vld [vmem:[%s1638 + $0xc8] sm:$0xff]
        %v1665 = vld [vmem:[%s1638 + $0xd0] sm:$0xff]
        %v1666 = vld [vmem:[%s1638 + $0xd8] sm:$0xff]
        %v1667 = vld [vmem:[%s1638 + $0xe0] sm:$0xff]
        %v1668 = vld [vmem:[%s1638 + $0xe8] sm:$0xff]
        %v1669 = vld [vmem:[%s1638 + $0xf0] sm:$0xff]
        %v1670 = vld [vmem:[%s1638 + $0xf8] sm:$0xff]
        %v1671 = vld [vmem:[%s1638 + $0x100] sm:$0xff]
        %v1672 = vld [vmem:[%s1638 + $0x108] sm:$0xff]
        %v1673 = vld [vmem:[%s1638 + $0x110] sm:$0xff]
        %v1674 = vld [vmem:[%s1638 + $0x118] sm:$0xff]
        %v1675 = vld [vmem:[%s1638 + $0x120] sm:$0xff]
        %v1676 = vld [vmem:[%s1638 + $0x128] sm:$0xff]
        %v1677 = vld [vmem:[%s1638 + $0x130] sm:$0xff]
        %v1678 = vld [vmem:[%s1638 + $0x138] sm:$0xff]
        %v1679 = vld [vmem:[%s1638 + $0x140] sm:$0xff]
        %v1680 = vld [vmem:[%s1638 + $0x148] sm:$0xff]
        %v1681 = vld [vmem:[%s1638 + $0x150] sm:$0xff]
        %v1682 = vld [vmem:[%s1638 + $0x158] sm:$0xff]
        %v1683 = vld [vmem:[%s1638 + $0x160] sm:$0xff]
        %v1684 = vld [vmem:[%s1638 + $0x168] sm:$0xff]
        %v1685 = vld [vmem:[%s1638 + $0x170] sm:$0xff]
        %v1686 = vld [vmem:[%s1638 + $0x178] sm:$0xff]
        %v1687 = vld [vmem:[%s1638 + $0x180] sm:$0xff]
        %v1688 = vld [vmem:[%s1638 + $0x188] sm:$0xff]
        %v1689 = vld [vmem:[%s1638 + $0x190] sm:$0xff]
        %v1690 = vld [vmem:[%s1638 + $0x198] sm:$0xff]
        %v1691 = vld [vmem:[%s1638 + $0x1a0] sm:$0xff]
        %v1692 = vld [vmem:[%s1638 + $0x1a8] sm:$0xff]
        %v1693 = vld [vmem:[%s1638 + $0x1b0] sm:$0xff]
        %v1694 = vld [vmem:[%s1638 + $0x1b8] sm:$0xff]
        %v1695 = vld [vmem:[%s1638 + $0x1c0] sm:$0xff]
        %v1696 = vld [vmem:[%s1638 + $0x1c8] sm:$0xff]
        %v1697 = vld [vmem:[%s1638 + $0x1d0] sm:$0xff]
        %v1698 = vld [vmem:[%s1638 + $0x1d8] sm:$0xff]
        %v1699 = vld [vmem:[%s1638 + $0x1e0] sm:$0xff]
        %v1700 = vld [vmem:[%s1638 + $0x1e8] sm:$0xff]
        %v1701 = vld [vmem:[%s1638 + $0x1f0] sm:$0xff]
        %v1702 = vld [vmem:[%s1638 + $0x1f8] sm:$0xff]
        %v1703 = vld [vmem:[%s1638 + $0x200] sm:$0xff]
        %v1704 = vld [vmem:[%s1638 + $0x208] sm:$0xff]
        %v1705 = vld [vmem:[%s1638 + $0x210] sm:$0xff]
        %v1706 = vld [vmem:[%s1638 + $0x218] sm:$0xff]
        %v1707 = vld [vmem:[%s1638 + $0x220] sm:$0xff]
        %v1708 = vld [vmem:[%s1638 + $0x228] sm:$0xff]
        %v1709 = vld [vmem:[%s1638 + $0x230] sm:$0xff]
        %v1710 = vld [vmem:[%s1638 + $0x238] sm:$0xff]
        %v1711 = vld [vmem:[%s1638 + $0x240] sm:$0xff]
        %v1712 = vld [vmem:[%s1638 + $0x248] sm:$0xff]
        %v1713 = vld [vmem:[%s1638 + $0x250] sm:$0xff]
        %v1714 = vld [vmem:[%s1638 + $0x258] sm:$0xff]
        %v1715 = vld [vmem:[%s1638 + $0x260] sm:$0xff]
        %v1716 = vld [vmem:[%s1638 + $0x268] sm:$0xff]
        %v1717 = vld [vmem:[%s1638 + $0x270] sm:$0xff]
        %v1718 = vld [vmem:[%s1638 + $0x278] sm:$0xff]
        %1719 = vmatprep.subr.mxu0 0.0
        %1720 = vmatpush1.msra.mxu0 %v1639
        %1721 = vmatprep.subr.mxu0 0.0
        %1722 = vmatpush1.msra.mxu0 %v1640
        %1723 = vmatprep.subr.mxu0 0.0
        %1724 = vmatpush1.msra.mxu0 %v1641
        %1725 = vmatprep.subr.mxu0 0.0
        %1726 = vmatpush1.msra.mxu0 %v1642
        %1727 = vmatprep.subr.mxu0 0.0
        %1728 = vmatpush1.msra.mxu0 %v1643
        %1729 = vmatprep.subr.mxu0 0.0
        %1730 = vmatpush1.msra.mxu0 %v1644
        %1731 = vmatprep.subr.mxu0 0.0
        %1732 = vmatpush1.msra.mxu0 %v1645
        %1733 = vmatprep.subr.mxu0 0.0
        %1734 = vmatpush1.msra.mxu0 %v1646
        %1735 = vmatprep.subr.mxu0 0.0
        %1736 = vmatpush1.msra.mxu0 %v1647
        %1737 = vmatprep.subr.mxu0 0.0
        %1738 = vmatpush1.msra.mxu0 %v1648
        %1739 = vmatprep.subr.mxu0 0.0
        %1740 = vmatpush1.msra.mxu0 %v1649
        %1741 = vmatprep.subr.mxu0 0.0
        %1742 = vmatpush1.msra.mxu0 %v1650
        %1743 = vmatprep.subr.mxu0 0.0
        %1744 = vmatpush1.msra.mxu0 %v1651
        %1745 = vmatprep.subr.mxu0 0.0
        %1746 = vmatpush1.msra.mxu0 %v1652
        %1747 = vmatprep.subr.mxu0 0.0
        %1748 = vmatpush1.msra.mxu0 %v1653
        %1749 = vmatprep.subr.mxu0 0.0
        %1750 = vmatpush1.msra.mxu0 %v1654
        %1751 = vmatprep.subr.mxu0 0.0
        %1752 = vmatpush1.msra.mxu0 %v1655
        %1753 = vmatprep.subr.mxu0 0.0
        %1754 = vmatpush1.msra.mxu0 %v1656
        %1755 = vmatprep.subr.mxu0 0.0
        %1756 = vmatpush1.msra.mxu0 %v1657
        %1757 = vmatprep.subr.mxu0 0.0
        %1758 = vmatpush1.msra.mxu0 %v1658
        %1759 = vmatprep.subr.mxu0 0.0
        %1760 = vmatpush1.msra.mxu0 %v1659
        %1761 = vmatprep.subr.mxu0 0.0
        %1762 = vmatpush1.msra.mxu0 %v1660
        %1763 = vmatprep.subr.mxu0 0.0
        %1764 = vmatpush1.msra.mxu0 %v1661
        %1765 = vmatprep.subr.mxu0 0.0
        %1766 = vmatpush1.msra.mxu0 %v1662
        %1767 = vmatprep.subr.mxu0 0.0
        %1768 = vmatpush1.msra.mxu0 %v1663
        %1769 = vmatprep.subr.mxu0 0.0
        %1770 = vmatpush1.msra.mxu0 %v1664
        %1771 = vmatprep.subr.mxu0 0.0
        %1772 = vmatpush1.msra.mxu0 %v1665
        %1773 = vmatprep.subr.mxu0 0.0
        %1774 = vmatpush1.msra.mxu0 %v1666
        %1775 = vmatprep.subr.mxu0 0.0
        %1776 = vmatpush1.msra.mxu0 %v1667
        %1777 = vmatprep.subr.mxu0 0.0
        %1778 = vmatpush1.msra.mxu0 %v1668
        %1779 = vmatprep.subr.mxu0 0.0
        %1780 = vmatpush1.msra.mxu0 %v1669
        %1781 = vmatprep.subr.mxu0 0.0
        %1782 = vmatpush1.msra.mxu0 %v1670
        %1783 = vmatprep.mubr.f32.mxu0 %v1630
        %1784 = vmatmul.mubr.f32.gmra.mrb[0].mxu0 %v1628
        %v1785 = vpop.f32.mrb[0].mxu0
        %v1786 = vadd.f32 0.0, %v1785
        %v1787 = vpop.f32.mrb[0].mxu0
        %1788 = vmatprep.mubr.f32.mxu0 %v1631
        %1789 = vmatmul.mubr.f32.gmra.mrb[0].mxu0 %v1629
        %v1790 = vpop.f32.mrb[0].mxu0
        %v1791 = vadd.f32 0.0, %v1790
        %v1792 = vpop.f32.mrb[0].mxu0
        %1793 = vdwg.mxu0
        %1794 = vmatprep.subr.mxu0 0.0
        %1795 = vmatpush1.msra.mxu0 %v1671
        %1796 = vmatprep.subr.mxu0 0.0
        %1797 = vmatpush1.msra.mxu0 %v1672
        %1798 = vmatprep.subr.mxu0 0.0
        %1799 = vmatpush1.msra.mxu0 %v1673
        %1800 = vmatprep.subr.mxu0 0.0
        %1801 = vmatpush1.msra.mxu0 %v1674
        %1802 = vmatprep.subr.mxu0 0.0
        %1803 = vmatpush1.msra.mxu0 %v1675
        %1804 = vmatprep.subr.mxu0 0.0
        %1805 = vmatpush1.msra.mxu0 %v1676
        %1806 = vmatprep.subr.mxu0 0.0
        %1807 = vmatpush1.msra.mxu0 %v1677
        %1808 = vmatprep.subr.mxu0 0.0
        %1809 = vmatpush1.msra.mxu0 %v1678
        %1810 = vmatprep.subr.mxu0 0.0
        %1811 = vmatpush1.msra.mxu0 %v1679
        %1812 = vmatprep.subr.mxu0 0.0
        %1813 = vmatpush1.msra.mxu0 %v1680
        %1814 = vmatprep.subr.mxu0 0.0
        %1815 = vmatpush1.msra.mxu0 %v1681
        %1816 = vmatprep.subr.mxu0 0.0
        %1817 = vmatpush1.msra.mxu0 %v1682
        %1818 = vmatprep.subr.mxu0 0.0
        %1819 = vmatpush1.msra.mxu0 %v1683
        %1820 = vmatprep.subr.mxu0 0.0
        %1821 = vmatpush1.msra.mxu0 %v1684
        %1822 = vmatprep.subr.mxu0 0.0
        %1823 = vmatpush1.msra.mxu0 %v1685
        %1824 = vmatprep.subr.mxu0 0.0
        %1825 = vmatpush1.msra.mxu0 %v1686
        %1826 = vmatprep.subr.mxu0 0.0
        %1827 = vmatpush1.msra.mxu0 %v1687
        %1828 = vmatprep.subr.mxu0 0.0
        %1829 = vmatpush1.msra.mxu0 %v1688
        %1830 = vmatprep.subr.mxu0 0.0
        %1831 = vmatpush1.msra.mxu0 %v1689
        %1832 = vmatprep.subr.mxu0 0.0
        %1833 = vmatpush1.msra.mxu0 %v1690
        %1834 = vmatprep.subr.mxu0 0.0
        %1835 = vmatpush1.msra.mxu0 %v1691
        %1836 = vmatprep.subr.mxu0 0.0
        %1837 = vmatpush1.msra.mxu0 %v1692
        %1838 = vmatprep.subr.mxu0 0.0
        %1839 = vmatpush1.msra.mxu0 %v1693
        %1840 = vmatprep.subr.mxu0 0.0
        %1841 = vmatpush1.msra.mxu0 %v1694
        %1842 = vmatprep.subr.mxu0 0.0
        %1843 = vmatpush1.msra.mxu0 %v1695
        %1844 = vmatprep.subr.mxu0 0.0
        %1845 = vmatpush1.msra.mxu0 %v1696
        %1846 = vmatprep.subr.mxu0 0.0
        %1847 = vmatpush1.msra.mxu0 %v1697
        %1848 = vmatprep.subr.mxu0 0.0
        %1849 = vmatpush1.msra.mxu0 %v1698
        %1850 = vmatprep.subr.mxu0 0.0
        %1851 = vmatpush1.msra.mxu0 %v1699
        %1852 = vmatprep.subr.mxu0 0.0
        %1853 = vmatpush1.msra.mxu0 %v1700
        %1854 = vmatprep.subr.mxu0 0.0
        %1855 = vmatpush1.msra.mxu0 %v1701
        %1856 = vmatprep.subr.mxu0 0.0
        %1857 = vmatpush1.msra.mxu0 %v1702
        %1858 = vmatprep.mubr.f32.mxu0 %v1634
        %1859 = vmatmul.mubr.f32.gmra.mrb[0].mxu0 %v1632
        %v1860 = vpop.f32.mrb[0].mxu0
        %v1861 = vadd.f32 %v1786, %v1860
        %v1862 = vpop.f32.mrb[0].mxu0
        %1863 = vmatprep.mubr.f32.mxu0 %v1635
        %1864 = vmatmul.mubr.f32.gmra.mrb[0].mxu0 %v1633
        %v1865 = vpop.f32.mrb[0].mxu0
        %v1866 = vadd.f32 %v1791, %v1865
        %v1867 = vpop.f32.mrb[0].mxu0
        %1868 = vdwg.mxu0
        %1869 = vmatprep.subr.mxu0 0.0
        %1870 = vmatpush1.msra.mxu0 %v1703
        %1871 = vmatprep.subr.mxu0 0.0
        %1872 = vmatpush1.msra.mxu0 %v1704
        %1873 = vmatprep.subr.mxu0 0.0
        %1874 = vmatpush1.msra.mxu0 %v1705
        %1875 = vmatprep.subr.mxu0 0.0
        %1876 = vmatpush1.msra.mxu0 %v1706
        %1877 = vmatprep.subr.mxu0 0.0
        %1878 = vmatpush1.msra.mxu0 %v1707
        %1879 = vmatprep.subr.mxu0 0.0
        %1880 = vmatpush1.msra.mxu0 %v1708
        %1881 = vmatprep.subr.mxu0 0.0
        %1882 = vmatpush1.msra.mxu0 %v1709
        %1883 = vmatprep.subr.mxu0 0.0
        %1884 = vmatpush1.msra.mxu0 %v1710
        %1885 = vmatprep.subr.mxu0 0.0
        %1886 = vmatpush1.msra.mxu0 %v1711
        %1887 = vmatprep.subr.mxu0 0.0
        %1888 = vmatpush1.msra.mxu0 %v1712
        %1889 = vmatprep.subr.mxu0 0.0
        %1890 = vmatpush1.msra.mxu0 %v1713
        %1891 = vmatprep.subr.mxu0 0.0
        %1892 = vmatpush1.msra.mxu0 %v1714
        %1893 = vmatprep.subr.mxu0 0.0
        %1894 = vmatpush1.msra.mxu0 %v1715
        %1895 = vmatprep.subr.mxu0 0.0
        %1896 = vmatpush1.msra.mxu0 %v1716
        %1897 = vmatprep.subr.mxu0 0.0
        %1898 = vmatpush1.msra.mxu0 %v1717
        %1899 = vmatprep.subr.mxu0 0.0
        %1900 = vmatpush1.msra.mxu0 %v1718
        %1901 = vmatprep.subr.mxu0 0.0
        %1902 = vmatpush1.msra.mxu0 0.0
        %1903 = vmatprep.subr.mxu0 0.0
        %1904 = vmatpush1.msra.mxu0 0.0
        %1905 = vmatprep.subr.mxu0 0.0
        %1906 = vmatpush1.msra.mxu0 0.0
        %1907 = vmatprep.subr.mxu0 0.0
        %1908 = vmatpush1.msra.mxu0 0.0
        %1909 = vmatprep.subr.mxu0 0.0
        %1910 = vmatpush1.msra.mxu0 0.0
        %1911 = vmatprep.subr.mxu0 0.0
        %1912 = vmatpush1.msra.mxu0 0.0
        %1913 = vmatprep.subr.mxu0 0.0
        %1914 = vmatpush1.msra.mxu0 0.0
        %1915 = vmatprep.subr.mxu0 0.0
        %1916 = vmatpush1.msra.mxu0 0.0
        %1917 = vmatprep.subr.mxu0 0.0
        %1918 = vmatpush1.msra.mxu0 0.0
        %1919 = vmatprep.subr.mxu0 0.0
        %1920 = vmatpush1.msra.mxu0 0.0
        %1921 = vmatprep.subr.mxu0 0.0
        %1922 = vmatpush1.msra.mxu0 0.0
        %1923 = vmatprep.subr.mxu0 0.0
        %1924 = vmatpush1.msra.mxu0 0.0
        %1925 = vmatprep.subr.mxu0 0.0
        %1926 = vmatpush1.msra.mxu0 0.0
        %1927 = vmatprep.subr.mxu0 0.0
        %1928 = vmatpush1.msra.mxu0 0.0
        %1929 = vmatprep.subr.mxu0 0.0
        %1930 = vmatpush1.msra.mxu0 0.0
        %1931 = vmatprep.subr.mxu0 0.0
        %1932 = vmatpush1.msra.mxu0 0.0
        %1933 = vmatprep.mubr.f32.mxu0 0.0
        %1934 = vmatmul.mubr.f32.gmra.mrb[0].mxu0 %v1636
        %v1935 = vpop.f32.mrb[0].mxu0
        %v1936 = vadd.f32 %v1861, %v1935
        %v1937 = vpop.f32.mrb[0].mxu0
        %1938 = vmatprep.mubr.f32.mxu0 0.0
        %1939 = vmatmul.mubr.f32.gmra.mrb[0].mxu0 %v1637
        %v1940 = vpop.f32.mrb[0].mxu0
        %v1941 = vadd.f32 %v1866, %v1940
        %v1942 = vpop.f32.mrb[0].mxu0
        %1943 = vdwg.mxu0
        %s1944 = scalar_lea.vmem [#allocation8], 4
        %v1945 = vld [vmem:[%s1944] sm:$0x1]
        %v1947 = vlaneseq
        %v1948 = vshrl.u32 %v1947, 7
        %v1949 = vsub.s32 0, %v1948
        %v1950 = vrot.slane %v1945, %v1949
        %v1952 = vmul.f32 %v1936, %v1950
        %v1953 = vmul.f32 %v1941, %v1950
        %s1954 = scalar_lea.vmem [#allocation9], 4
        %v1955 = vld [vmem:[%s1954] sm:$0x1]
        %v1957 = vlaneseq
        %v1958 = vshrl.u32 %v1957, 7
        %v1959 = vsub.s32 0, %v1958
        %v1960 = vrot.slane %v1955, %v1959
        %v1962 = vadd.f32 %v1952, %v1960
        %v1963 = vadd.f32 %v1953, %v1960
        %1964 = vst [vmem:[%s259] sm:$0xff] %v1962
        %1965 = vst [vmem:[%s259 + $0x8] sm:$0xff] %v1963
        %s1966 = sand.u32 %s120, 1
        %s1967 = scalar_lea.sflag [#allocation5], %s1966
        %s1968 = sand.u32 %s120, 1
        %s1969 = smul.addr %s1968, 16
        %s1970 = scalar_lea.vmem [#allocation11], %s1969
        // Predicated region
        $region53: #{tpu_custom_call.1} parent=35 // pred_check
          %p1971 = pneg %p130
        $region54: #{tpu_custom_call.1} parent=35 // pred_check_branch
          %1973 = sbr.rel (%p1971) target = $region56
        $region55: #{tpu_custom_call.1} parent=35 // pred_region
          %s1975 = ssub.s32 256, 256
          %1976 = vsyncadd %s1967, %s1975
          %s1977 = smul.addr %s23, 2
          %s1978 = smul.addr %s1977, 128
          %s1979 = scalar_lea.hbm %s4, %s1978
          %s1980 = sshll.u32 %s1970, 4
          %s1981 = int_to_ptr.vmem [resolvable:$true] %s1980
          %1986 = dma.vmem_to_hbm [thread:$0]  %s1981, 256, %s1979, %s1967, 128, 128, 8
        $region56: #{tpu_custom_call.1} parent=35 // pred_fallthru
          _
      $region36: #{tpu_custom_call.1} parent=5 // pred_fallthru
        _
      %p1987 = scmp.le.s32.totalorder 2, %s18
      // Predicated region
      $region57: #{tpu_custom_call.1} parent=5 // pred_check
        %p1988 = pneg %p1987
      $region58: #{tpu_custom_call.1} parent=5 // pred_check_branch
        %1990 = sbr.rel (%p1988) target = $region60
      $region59: #{tpu_custom_call.1} parent=5 // pred_region
        %s1991 = ssub.s32 %s18, 2
        // Predicated region
        $region61: #{tpu_custom_call.1} parent=59 // pred_check
          %p1992 = pneg %p136
        $region62: #{tpu_custom_call.1} parent=59 // pred_check_branch
          %1994 = sbr.rel (%p1992) target = $region64
        $region63: #{tpu_custom_call.1} parent=59 // pred_region
          %s1995 = sand.u32 %s121, 1
          %s1996 = scalar_lea.sflag [#allocation5], %s1995
          %s1997 = sand.u32 %s121, 1
          %s1998 = smul.addr %s1997, 16
          %s1999 = scalar_lea.vmem [#allocation11], %s1998
          %2000 = dma.done %s1996, 256
        $region64: #{tpu_custom_call.1} parent=59 // pred_fallthru
          _
      $region60: #{tpu_custom_call.1} parent=5 // pred_fallthru
        _
    $region6: #{tpu_custom_call.1} parent=1 // loop_footer
      %s22 = sadd.s32 1, %s18
    $region7: #{tpu_custom_call.1} parent=1 // loop_footer_branch
      %17 = sbr.rel target = $region3
    $region8: #{tpu_custom_call.1} parent=1 // loop_exit
      _
    %2001 = vsyncpa [#allocation4], 1
    %s2002 = scalar_lea.sflag [#allocation4], 1
    %2003 = vsyncpa %s2002, 1
    %2004 = vsyncpa [#allocation7], 1
    %2005 = vsyncpa [#allocation10], 1
    %2006 = vsyncpa [#allocation5], 1
    %s2007 = scalar_lea.sflag [#allocation5], 1
    %2008 = vsyncpa %s2007, 1

</llo_original>
